<compile_context>
chip_gen: v7x
topology: tpu7x:2x2x1
jax: 0.10.0
libtpu: 0.0.40
codegen_flags: <defaults>
</compile_context>

<pallas_src>
import functools

import jax
import jax.numpy as jnp
from jax.experimental import pallas as pl
from jax.experimental.pallas import tpu as pltpu

EPS = 1e-5


def _basic_block_kernel(x_ref, w1_ref, w2_ref, g1_ref, b1_ref, g2_ref, b2_ref,
                        selc_ref, selr_ref, out_ref, pad_ref, *, B, H, W, C):
    """Fused BasicBlock forward on a lane-dense (H, B*W*C) activation slab."""
    Hp, Wp = H + 2, W + 2
    inv_n = 1.0 / float(B * H * W)          # BN sample count per channel

    x2d = x_ref[...]                        # (H, B*W*C) f32, lane-dense

    # ---- zero-padded input slab in VMEM: zero only the 1-pixel halo (once) ----
    zero_row = jnp.zeros((1, B * Wp * C), jnp.float32)
    pad_ref[0:1, :] = zero_row
    pad_ref[Hp - 1:Hp, :] = zero_row
    zero_col = jnp.zeros((H, C), jnp.float32)
    for b in range(B):                      # static unroll, B is tiny
        lo = b * Wp * C
        pad_ref[1:1 + H, lo:lo + C] = zero_col
        pad_ref[1:1 + H, lo + (W + 1) * C:lo + Wp * C] = zero_col
        pad_ref[1:1 + H, lo + C:lo + (W + 1) * C] = x2d[:, b * W * C:(b + 1) * W * C]

    def conv3x3(w_ref):
        # kw taps + input channels are folded into K by the banded weight
        # matrix (built in the wrapper), so the 3x3 conv is just 3 MXU matmuls
        # (one per kh row), bf16 inputs / f32 accumulation.
        acc = jnp.dot(pad_ref[0:H, :].astype(jnp.bfloat16), w_ref[0],
                      preferred_element_type=jnp.float32)
        for kh in (1, 2):
            acc += jnp.dot(pad_ref[kh:kh + H, :].astype(jnp.bfloat16), w_ref[kh],
                           preferred_element_type=jnp.float32)
        return acc                          # (H, B*W*C) f32

    def bn_scale_shift(acc, g_ref, b_ref):
        # Training-mode batch stats over N*H*W, single pass (sum + sum-of-squares,
        # var = E[x^2] - E[x]^2).  selc folds lanes -> channels, selr expands the
        # per-channel scale/shift back to lanes so normalization stays lane-dense.
        s = jnp.sum(jnp.dot(acc, selc_ref[...],
                            preferred_element_type=jnp.float32),
                    axis=0, keepdims=True)                       # (1, C)
        q = jnp.sum(jnp.dot(acc * acc, selc_ref[...],
                            preferred_element_type=jnp.float32),
                    axis=0, keepdims=True)                       # (1, C)
        mean = s * inv_n
        var = q * inv_n - mean * mean
        scale = g_ref[...] * jax.lax.rsqrt(var + EPS)            # (1, C)
        shift = b_ref[...] - mean * scale                        # (1, C)
        scale_l = jnp.dot(scale, selr_ref[...],
                          preferred_element_type=jnp.float32)    # (1, B*W*C)
        shift_l = jnp.dot(shift, selr_ref[...],
                          preferred_element_type=jnp.float32)
        return scale_l, shift_l

    # ---- conv1 -> bn1 -> relu ----
    acc1 = conv3x3(w1_ref)
    sc1, sh1 = bn_scale_shift(acc1, g1_ref, b1_ref)
    y1 = jnp.maximum(acc1 * sc1 + sh1, 0.0)

    # Stage the relu output back into the padded slab; the halo is still zero,
    # so the scratch is reused for conv2 without re-zeroing.
    for b in range(B):
        lo = b * Wp * C
        pad_ref[1:1 + H, lo + C:lo + (W + 1) * C] = y1[:, b * W * C:(b + 1) * W * C]

    # ---- conv2 -> bn2 -> residual add (identity, downsample=None) -> relu ----
    acc2 = conv3x3(w2_ref)
    sc2, sh2 = bn_scale_shift(acc2, g2_ref, b2_ref)
    y2 = acc2 * sc2 + sh2

    out_ref[...] = jnp.maximum(y2 + x2d, 0.0)   # lane-dense, unmasked store


def _banded_conv_weights(w, batch, width):
    """Fold a (3,3,Cin,Cout) HWIO kernel into 3 banded matmul operands.

    Entry kh maps the padded lane slab (batch*(width+2)*Cin lanes) to the output
    lane slab (batch*width*Cout lanes): the kw taps and input channels are
    absorbed into the contraction dim, batches stay independent via a
    block-diagonal structure.  Built once per call, wrapper-side (layout
    plumbing, not kernel compute).
    """
    kh_dim, kw_dim, _, _ = w.shape
    wp = width + 2
    mats = []
    for kh in range(kh_dim):
        m = sum(jnp.kron(jnp.eye(wp, width, -kw, dtype=w.dtype), w[kh, kw])
                for kw in range(kw_dim))
        mats.append(jnp.kron(jnp.eye(batch, dtype=w.dtype), m))
    return jnp.stack(mats).astype(jnp.bfloat16)


def basic_block(x, w1, g1, b1, w2, g2, b2):
    """BasicBlock forward. x: (B,H,W,C) f32 NHWC; w*: (3,3,C,C) HWIO; g*/b*: (C,)."""
    B, H, W, C = x.shape
    assert w1.shape == (3, 3, C, C) and w2.shape == (3, 3, C, C)

    # Lane-dense slab: fold batch into the lane dim so the last dim is B*W*C
    # (=128 here) -> unmasked full-lane loads/stores and 128-lane VPU work.
    x2d = jnp.transpose(x, (1, 0, 2, 3)).reshape(H, B * W * C)

    w1b = _banded_conv_weights(w1, B, W)     # (3, B*(W+2)*C, B*W*C) bf16
    w2b = _banded_conv_weights(w2, B, W)
    g1r, b1r = g1.reshape(1, C), b1.reshape(1, C)
    g2r, b2r = g2.reshape(1, C), b2.reshape(1, C)
    # lane <-> channel selectors (lane l carries channel l % C)
    selc = jnp.tile(jnp.eye(C, dtype=jnp.float32), (B * W, 1))   # (B*W*C, C)
    selr = selc.T                                                # (C, B*W*C)

    kernel = functools.partial(_basic_block_kernel, B=B, H=H, W=W, C=C)

    def fullspec(shape):
        nd = len(shape)
        return pl.BlockSpec(shape, lambda i, nd=nd: (0,) * nd)

    out2d = pl.pallas_call(
        kernel,
        out_shape=jax.ShapeDtypeStruct((H, B * W * C), jnp.float32),
        grid=(1,),   # single fused step: BN needs global N*H*W stats; whole
                     # working set (~0.3 MiB incl. weights) fits VMEM easily.
        in_specs=[fullspec(x2d.shape), fullspec(w1b.shape), fullspec(w2b.shape),
                  fullspec(g1r.shape), fullspec(b1r.shape),
                  fullspec(g2r.shape), fullspec(b2r.shape),
                  fullspec(selc.shape), fullspec(selr.shape)],
        out_specs=fullspec((H, B * W * C)),
        scratch_shapes=[pltpu.VMEM((H + 2, B * (W + 2) * C), jnp.float32)],
        compiler_params=pltpu.CompilerParams(
            dimension_semantics=("arbitrary",)),
    )(x2d, w1b, w2b, g1r, b1r, g2r, b2r, selc, selr)

    return jnp.transpose(out2d.reshape(H, B, W, C), (1, 0, 2, 3))


def reference(x, w1, g1, b1, w2, g2, b2):
    """Pure-JAX (f32, HIGHEST precision) reference of the same forward pass."""
    def conv(a, w):
        return jax.lax.conv_general_dilated(
            a, w, (1, 1), 'SAME',
            dimension_numbers=('NHWC', 'HWIO', 'NHWC'),
            precision=jax.lax.Precision.HIGHEST)

    def bn(a, g, b):
        m = jnp.mean(a, axis=(0, 1, 2), keepdims=True)
        v = jnp.mean((a - m) ** 2, axis=(0, 1, 2), keepdims=True)
        return (a - m) * jax.lax.rsqrt(v + EPS) * g + b

    out = jax.nn.relu(bn(conv(x, w1), g1, b1))
    out = bn(conv(out, w2), g2, b2) + x
    return jax.nn.relu(out)


if __name__ == "__main__":
    # BasicBlock(inplanes=4, planes=4, stride=1, downsample=None)
    B, C, H, W = 2, 4, 16, 16

    key = jax.random.PRNGKey(0)
    kx, k1, k2, kg1, kb1, kg2, kb2 = jax.random.split(key, 7)

    # PyTorch input is NCHW; transpose to NHWC for the kernel / reference.
    x_nchw = jax.random.normal(kx, (B, C, H, W), jnp.float32)
    x = jnp.transpose(x_nchw, (0, 2, 3, 1))

    # Deterministic synthetic parameters (conv weights HWIO, BN affine params).
    w1 = 0.1 * jax.random.normal(k1, (3, 3, C, C), jnp.float32)
    w2 = 0.1 * jax.random.normal(k2, (3, 3, C, C), jnp.float32)
    g1 = 1.0 + 0.1 * jax.random.normal(kg1, (C,), jnp.float32)
    b1 = 0.1 * jax.random.normal(kb1, (C,), jnp.float32)
    g2 = 1.0 + 0.1 * jax.random.normal(kg2, (C,), jnp.float32)
    b2 = 0.1 * jax.random.normal(kb2, (C,), jnp.float32)

    out = jax.block_until_ready(basic_block(x, w1, g1, b1, w2, g2, b2))
    ref = jax.block_until_ready(reference(x, w1, g1, b1, w2, g2, b2))

    assert out.shape == (B, H, W, C)
    # Tolerance sized for bf16 MXU inputs (f32 accumulation, f32 BN math).
    assert jnp.allclose(out, ref, rtol=2e-2, atol=2e-2), (
        float(jnp.max(jnp.abs(out - ref))))

    print("KERNEL_OK")
</pallas_src>

<mosaic_0001>
module attributes {stable_mosaic.version = 11 : i64} {
  func.func @_basic_block_kernel(%arg0: i32, %arg1: memref<16x128xf32, #tpu.memory_space<vmem>>, %arg2: memref<3x144x128xbf16, #tpu.memory_space<vmem>>, %arg3: memref<3x144x128xbf16, #tpu.memory_space<vmem>>, %arg4: memref<1x4xf32, #tpu.memory_space<vmem>>, %arg5: memref<1x4xf32, #tpu.memory_space<vmem>>, %arg6: memref<1x4xf32, #tpu.memory_space<vmem>>, %arg7: memref<1x4xf32, #tpu.memory_space<vmem>>, %arg8: memref<128x4xf32, #tpu.memory_space<vmem>>, %arg9: memref<4x128xf32, #tpu.memory_space<vmem>>, %arg10: memref<16x128xf32, #tpu.memory_space<vmem>>, %arg11: memref<18x144xf32, #tpu.memory_space<vmem>>) attributes {dimension_semantics = [#tpu.dimension_semantics<arbitrary>], iteration_bounds = array<i64: 1>, scalar_prefetch = 0 : i64, scratch_operands = 1 : i64, tpu.core_type = #tpu.core_type<tc>, window_params = [{pipeline_mode = #tpu.pipeline_mode<synchronous>, transform_indices = @transform_0, window_bounds = array<i64: 16, 128>}, {pipeline_mode = #tpu.pipeline_mode<synchronous>, transform_indices = @transform_1, window_bounds = array<i64: 3, 144, 128>}, {pipeline_mode = #tpu.pipeline_mode<synchronous>, transform_indices = @transform_2, window_bounds = array<i64: 3, 144, 128>}, {pipeline_mode = #tpu.pipeline_mode<synchronous>, transform_indices = @transform_3, window_bounds = array<i64: 1, 4>}, {pipeline_mode = #tpu.pipeline_mode<synchronous>, transform_indices = @transform_4, window_bounds = array<i64: 1, 4>}, {pipeline_mode = #tpu.pipeline_mode<synchronous>, transform_indices = @transform_5, window_bounds = array<i64: 1, 4>}, {pipeline_mode = #tpu.pipeline_mode<synchronous>, transform_indices = @transform_6, window_bounds = array<i64: 1, 4>}, {pipeline_mode = #tpu.pipeline_mode<synchronous>, transform_indices = @transform_7, window_bounds = array<i64: 128, 4>}, {pipeline_mode = #tpu.pipeline_mode<synchronous>, transform_indices = @transform_8, window_bounds = array<i64: 4, 128>}, {pipeline_mode = #tpu.pipeline_mode<synchronous>, transform_indices = @transform_9, window_bounds = array<i64: 16, 128>}]} {
    %c0 = arith.constant 0 : index
    %c0_0 = arith.constant 0 : index
    %0 = vector.load %arg1[%c0, %c0_0] : memref<16x128xf32, #tpu.memory_space<vmem>>, vector<16x128xf32>
    %cst = arith.constant 0.000000e+00 : f32
    %1 = vector.broadcast %cst : f32 to vector<1x144xf32>
    %c0_1 = arith.constant 0 : index
    %c0_2 = arith.constant 0 : index
    %2 = vector.load %arg11[%c0_1, %c0_2] : memref<18x144xf32, #tpu.memory_space<vmem>>, vector<1x144xf32>
    tpu.vector_store %arg11[%c0_1, %c0_2], %1 {strides = array<i32>} : memref<18x144xf32, #tpu.memory_space<vmem>>, vector<1x144xf32>,
    %c17 = arith.constant 17 : index
    %c0_3 = arith.constant 0 : index
    %3 = vector.load %arg11[%c17, %c0_3] : memref<18x144xf32, #tpu.memory_space<vmem>>, vector<1x144xf32>
    tpu.vector_store %arg11[%c17, %c0_3], %1 {strides = array<i32>} : memref<18x144xf32, #tpu.memory_space<vmem>>, vector<1x144xf32>,
    %cst_4 = arith.constant 0.000000e+00 : f32
    %4 = vector.broadcast %cst_4 : f32 to vector<16x4xf32>
    %c1 = arith.constant 1 : index
    %c0_5 = arith.constant 0 : index
    %5 = vector.load %arg11[%c1, %c0_5] : memref<18x144xf32, #tpu.memory_space<vmem>>, vector<16x4xf32>
    tpu.vector_store %arg11[%c1, %c0_5], %4 {strides = array<i32>} : memref<18x144xf32, #tpu.memory_space<vmem>>, vector<16x4xf32>,
    %c1_6 = arith.constant 1 : index
    %c68 = arith.constant 68 : index
    %6 = vector.load %arg11[%c1_6, %c68] : memref<18x144xf32, #tpu.memory_space<vmem>>, vector<16x4xf32>
    tpu.vector_store %arg11[%c1_6, %c68], %4 {strides = array<i32>} : memref<18x144xf32, #tpu.memory_space<vmem>>, vector<16x4xf32>,
    %7 = vector.extract_strided_slice %0 {offsets = [0, 0], sizes = [16, 64], strides = [1, 1]} : vector<16x128xf32> to vector<16x64xf32>
    %c1_7 = arith.constant 1 : index
    %c4 = arith.constant 4 : index
    %8 = vector.load %arg11[%c1_7, %c4] : memref<18x144xf32, #tpu.memory_space<vmem>>, vector<16x64xf32>
    tpu.vector_store %arg11[%c1_7, %c4], %7 {strides = array<i32>} : memref<18x144xf32, #tpu.memory_space<vmem>>, vector<16x64xf32>,
    %c1_8 = arith.constant 1 : index
    %c72 = arith.constant 72 : index
    %9 = vector.load %arg11[%c1_8, %c72] : memref<18x144xf32, #tpu.memory_space<vmem>>, vector<16x4xf32>
    tpu.vector_store %arg11[%c1_8, %c72], %4 {strides = array<i32>} : memref<18x144xf32, #tpu.memory_space<vmem>>, vector<16x4xf32>,
    %c1_9 = arith.constant 1 : index
    %c140 = arith.constant 140 : index
    %10 = vector.load %arg11[%c1_9, %c140] : memref<18x144xf32, #tpu.memory_space<vmem>>, vector<16x4xf32>
    tpu.vector_store %arg11[%c1_9, %c140], %4 {strides = array<i32>} : memref<18x144xf32, #tpu.memory_space<vmem>>, vector<16x4xf32>,
    %11 = vector.extract_strided_slice %0 {offsets = [0, 64], sizes = [16, 64], strides = [1, 1]} : vector<16x128xf32> to vector<16x64xf32>
    %c1_10 = arith.constant 1 : index
    %c76 = arith.constant 76 : index
    %12 = vector.load %arg11[%c1_10, %c76] : memref<18x144xf32, #tpu.memory_space<vmem>>, vector<16x64xf32>
    tpu.vector_store %arg11[%c1_10, %c76], %11 {strides = array<i32>} : memref<18x144xf32, #tpu.memory_space<vmem>>, vector<16x64xf32>,
    %c0_11 = arith.constant 0 : index
    %c0_12 = arith.constant 0 : index
    %13 = vector.load %arg11[%c0_11, %c0_12] : memref<18x144xf32, #tpu.memory_space<vmem>>, vector<16x144xf32>
    %14 = arith.truncf %13 : vector<16x144xf32> to vector<16x144xbf16>
    %c0_13 = arith.constant 0 : index
    %c0_14 = arith.constant 0 : index
    %c0_15 = arith.constant 0 : index
    %15 = vector.load %arg2[%c0_13, %c0_14, %c0_15] : memref<3x144x128xbf16, #tpu.memory_space<vmem>>, vector<1x144x128xbf16>
    %16 = vector.shape_cast %15 : vector<1x144x128xbf16> to vector<144x128xbf16>
    %cst_16 = arith.constant dense<0.000000e+00> : vector<16x128xf32>
    %17 = tpu.matmul %14, %16, %cst_16 {dimension_numbers = #tpu.dot_dimension_numbers<[1], [0], [0], [1], [0, 0, 1, 1], [], []>} : vector<16x144xbf16>, vector<144x128xbf16>, vector<16x128xf32> -> vector<16x128xf32>
    %c1_17 = arith.constant 1 : index
    %c0_18 = arith.constant 0 : index
    %18 = vector.load %arg11[%c1_17, %c0_18] : memref<18x144xf32, #tpu.memory_space<vmem>>, vector<16x144xf32>
    %19 = arith.truncf %18 : vector<16x144xf32> to vector<16x144xbf16>
    %c1_19 = arith.constant 1 : index
    %c0_20 = arith.constant 0 : index
    %c0_21 = arith.constant 0 : index
    %20 = vector.load %arg2[%c1_19, %c0_20, %c0_21] : memref<3x144x128xbf16, #tpu.memory_space<vmem>>, vector<1x144x128xbf16>
    %21 = vector.shape_cast %20 : vector<1x144x128xbf16> to vector<144x128xbf16>
    %cst_22 = arith.constant dense<0.000000e+00> : vector<16x128xf32>
    %22 = tpu.matmul %19, %21, %cst_22 {dimension_numbers = #tpu.dot_dimension_numbers<[1], [0], [0], [1], [0, 0, 1, 1], [], []>} : vector<16x144xbf16>, vector<144x128xbf16>, vector<16x128xf32> -> vector<16x128xf32>
    %23 = arith.addf %17, %22 : vector<16x128xf32>
    %c2 = arith.constant 2 : index
    %c0_23 = arith.constant 0 : index
    %24 = vector.load %arg11[%c2, %c0_23] : memref<18x144xf32, #tpu.memory_space<vmem>>, vector<16x144xf32>
    %25 = arith.truncf %24 : vector<16x144xf32> to vector<16x144xbf16>
    %c2_24 = arith.constant 2 : index
    %c0_25 = arith.constant 0 : index
    %c0_26 = arith.constant 0 : index
    %26 = vector.load %arg2[%c2_24, %c0_25, %c0_26] : memref<3x144x128xbf16, #tpu.memory_space<vmem>>, vector<1x144x128xbf16>
    %27 = vector.shape_cast %26 : vector<1x144x128xbf16> to vector<144x128xbf16>
    %cst_27 = arith.constant dense<0.000000e+00> : vector<16x128xf32>
    %28 = tpu.matmul %25, %27, %cst_27 {dimension_numbers = #tpu.dot_dimension_numbers<[1], [0], [0], [1], [0, 0, 1, 1], [], []>} : vector<16x144xbf16>, vector<144x128xbf16>, vector<16x128xf32> -> vector<16x128xf32>
    %29 = arith.addf %23, %28 : vector<16x128xf32>
    %c0_28 = arith.constant 0 : index
    %c0_29 = arith.constant 0 : index
    %30 = vector.load %arg8[%c0_28, %c0_29] : memref<128x4xf32, #tpu.memory_space<vmem>>, vector<128x4xf32>
    %cst_30 = arith.constant dense<0.000000e+00> : vector<16x4xf32>
    %31 = tpu.matmul %29, %30, %cst_30 {dimension_numbers = #tpu.dot_dimension_numbers<[1], [0], [0], [1], [0, 0, 1, 1], [], []>} : vector<16x128xf32>, vector<128x4xf32>, vector<16x4xf32> -> vector<16x4xf32>
    %cst_31 = arith.constant dense<0.000000e+00> : vector<4xf32>
    %32 = vector.multi_reduction <add>, %31, %cst_31 [0] : vector<16x4xf32> to vector<4xf32>
    %33 = vector.shape_cast %32 : vector<4xf32> to vector<1x4xf32>
    %34 = arith.mulf %29, %29 : vector<16x128xf32>
    %c0_32 = arith.constant 0 : index
    %c0_33 = arith.constant 0 : index
    %35 = vector.load %arg8[%c0_32, %c0_33] : memref<128x4xf32, #tpu.memory_space<vmem>>, vector<128x4xf32>
    %cst_34 = arith.constant dense<0.000000e+00> : vector<16x4xf32>
    %36 = tpu.matmul %34, %35, %cst_34 {dimension_numbers = #tpu.dot_dimension_numbers<[1], [0], [0], [1], [0, 0, 1, 1], [], []>} : vector<16x128xf32>, vector<128x4xf32>, vector<16x4xf32> -> vector<16x4xf32>
    %cst_35 = arith.constant dense<0.000000e+00> : vector<4xf32>
    %37 = vector.multi_reduction <add>, %36, %cst_35 [0] : vector<16x4xf32> to vector<4xf32>
    %38 = vector.shape_cast %37 : vector<4xf32> to vector<1x4xf32>
    %cst_36 = arith.constant 0.001953125 : f32
    %39 = vector.broadcast %cst_36 : f32 to vector<1x4xf32>
    %40 = arith.mulf %33, %39 : vector<1x4xf32>
    %cst_37 = arith.constant 0.001953125 : f32
    %41 = vector.broadcast %cst_37 : f32 to vector<1x4xf32>
    %42 = arith.mulf %38, %41 : vector<1x4xf32>
    %43 = arith.mulf %40, %40 : vector<1x4xf32>
    %44 = arith.subf %42, %43 : vector<1x4xf32>
    %c0_38 = arith.constant 0 : index
    %c0_39 = arith.constant 0 : index
    %45 = vector.load %arg4[%c0_38, %c0_39] : memref<1x4xf32, #tpu.memory_space<vmem>>, vector<1x4xf32>
    %cst_40 = arith.constant 9.99999974E-6 : f32
    %46 = vector.broadcast %cst_40 : f32 to vector<1x4xf32>
    %47 = arith.addf %44, %46 : vector<1x4xf32>
    %48 = math.rsqrt %47 : vector<1x4xf32>
    %49 = arith.mulf %45, %48 : vector<1x4xf32>
    %c0_41 = arith.constant 0 : index
    %c0_42 = arith.constant 0 : index
    %50 = vector.load %arg5[%c0_41, %c0_42] : memref<1x4xf32, #tpu.memory_space<vmem>>, vector<1x4xf32>
    %51 = arith.mulf %40, %49 : vector<1x4xf32>
    %52 = arith.subf %50, %51 : vector<1x4xf32>
    %c0_43 = arith.constant 0 : index
    %c0_44 = arith.constant 0 : index
    %53 = vector.load %arg9[%c0_43, %c0_44] : memref<4x128xf32, #tpu.memory_space<vmem>>, vector<4x128xf32>
    %cst_45 = arith.constant dense<0.000000e+00> : vector<1x128xf32>
    %54 = tpu.matmul %49, %53, %cst_45 {dimension_numbers = #tpu.dot_dimension_numbers<[1], [0], [0], [1], [0, 0, 1, 1], [], []>} : vector<1x4xf32>, vector<4x128xf32>, vector<1x128xf32> -> vector<1x128xf32>
    %c0_46 = arith.constant 0 : index
    %c0_47 = arith.constant 0 : index
    %55 = vector.load %arg9[%c0_46, %c0_47] : memref<4x128xf32, #tpu.memory_space<vmem>>, vector<4x128xf32>
    %cst_48 = arith.constant dense<0.000000e+00> : vector<1x128xf32>
    %56 = tpu.matmul %52, %55, %cst_48 {dimension_numbers = #tpu.dot_dimension_numbers<[1], [0], [0], [1], [0, 0, 1, 1], [], []>} : vector<1x4xf32>, vector<4x128xf32>, vector<1x128xf32> -> vector<1x128xf32>
    %57 = vector.broadcast %54 : vector<1x128xf32> to vector<16x128xf32>
    %58 = arith.mulf %29, %57 : vector<16x128xf32>
    %59 = vector.broadcast %56 : vector<1x128xf32> to vector<16x128xf32>
    %60 = arith.addf %58, %59 : vector<16x128xf32>
    %cst_49 = arith.constant 0.000000e+00 : f32
    %61 = vector.broadcast %cst_49 : f32 to vector<16x128xf32>
    %62 = arith.maximumf %60, %61 : vector<16x128xf32>
    %63 = vector.extract_strided_slice %62 {offsets = [0, 0], sizes = [16, 64], strides = [1, 1]} : vector<16x128xf32> to vector<16x64xf32>
    %c1_50 = arith.constant 1 : index
    %c4_51 = arith.constant 4 : index
    %64 = vector.load %arg11[%c1_50, %c4_51] : memref<18x144xf32, #tpu.memory_space<vmem>>, vector<16x64xf32>
    tpu.vector_store %arg11[%c1_50, %c4_51], %63 {strides = array<i32>} : memref<18x144xf32, #tpu.memory_space<vmem>>, vector<16x64xf32>,
    %65 = vector.extract_strided_slice %62 {offsets = [0, 64], sizes = [16, 64], strides = [1, 1]} : vector<16x128xf32> to vector<16x64xf32>
    %c1_52 = arith.constant 1 : index
    %c76_53 = arith.constant 76 : index
    %66 = vector.load %arg11[%c1_52, %c76_53] : memref<18x144xf32, #tpu.memory_space<vmem>>, vector<16x64xf32>
    tpu.vector_store %arg11[%c1_52, %c76_53], %65 {strides = array<i32>} : memref<18x144xf32, #tpu.memory_space<vmem>>, vector<16x64xf32>,
    %c0_54 = arith.constant 0 : index
    %c0_55 = arith.constant 0 : index
    %67 = vector.load %arg11[%c0_54, %c0_55] : memref<18x144xf32, #tpu.memory_space<vmem>>, vector<16x144xf32>
    %68 = arith.truncf %67 : vector<16x144xf32> to vector<16x144xbf16>
    %c0_56 = arith.constant 0 : index
    %c0_57 = arith.constant 0 : index
    %c0_58 = arith.constant 0 : index
    %69 = vector.load %arg3[%c0_56, %c0_57, %c0_58] : memref<3x144x128xbf16, #tpu.memory_space<vmem>>, vector<1x144x128xbf16>
    %70 = vector.shape_cast %69 : vector<1x144x128xbf16> to vector<144x128xbf16>
    %cst_59 = arith.constant dense<0.000000e+00> : vector<16x128xf32>
    %71 = tpu.matmul %68, %70, %cst_59 {dimension_numbers = #tpu.dot_dimension_numbers<[1], [0], [0], [1], [0, 0, 1, 1], [], []>} : vector<16x144xbf16>, vector<144x128xbf16>, vector<16x128xf32> -> vector<16x128xf32>
    %c1_60 = arith.constant 1 : index
    %c0_61 = arith.constant 0 : index
    %72 = vector.load %arg11[%c1_60, %c0_61] : memref<18x144xf32, #tpu.memory_space<vmem>>, vector<16x144xf32>
    %73 = arith.truncf %72 : vector<16x144xf32> to vector<16x144xbf16>
    %c1_62 = arith.constant 1 : index
    %c0_63 = arith.constant 0 : index
    %c0_64 = arith.constant 0 : index
    %74 = vector.load %arg3[%c1_62, %c0_63, %c0_64] : memref<3x144x128xbf16, #tpu.memory_space<vmem>>, vector<1x144x128xbf16>
    %75 = vector.shape_cast %74 : vector<1x144x128xbf16> to vector<144x128xbf16>
    %cst_65 = arith.constant dense<0.000000e+00> : vector<16x128xf32>
    %76 = tpu.matmul %73, %75, %cst_65 {dimension_numbers = #tpu.dot_dimension_numbers<[1], [0], [0], [1], [0, 0, 1, 1], [], []>} : vector<16x144xbf16>, vector<144x128xbf16>, vector<16x128xf32> -> vector<16x128xf32>
    %77 = arith.addf %71, %76 : vector<16x128xf32>
    %c2_66 = arith.constant 2 : index
    %c0_67 = arith.constant 0 : index
    %78 = vector.load %arg11[%c2_66, %c0_67] : memref<18x144xf32, #tpu.memory_space<vmem>>, vector<16x144xf32>
    %79 = arith.truncf %78 : vector<16x144xf32> to vector<16x144xbf16>
    %c2_68 = arith.constant 2 : index
    %c0_69 = arith.constant 0 : index
    %c0_70 = arith.constant 0 : index
    %80 = vector.load %arg3[%c2_68, %c0_69, %c0_70] : memref<3x144x128xbf16, #tpu.memory_space<vmem>>, vector<1x144x128xbf16>
    %81 = vector.shape_cast %80 : vector<1x144x128xbf16> to vector<144x128xbf16>
    %cst_71 = arith.constant dense<0.000000e+00> : vector<16x128xf32>
    %82 = tpu.matmul %79, %81, %cst_71 {dimension_numbers = #tpu.dot_dimension_numbers<[1], [0], [0], [1], [0, 0, 1, 1], [], []>} : vector<16x144xbf16>, vector<144x128xbf16>, vector<16x128xf32> -> vector<16x128xf32>
    %83 = arith.addf %77, %82 : vector<16x128xf32>
    %c0_72 = arith.constant 0 : index
    %c0_73 = arith.constant 0 : index
    %84 = vector.load %arg8[%c0_72, %c0_73] : memref<128x4xf32, #tpu.memory_space<vmem>>, vector<128x4xf32>
    %cst_74 = arith.constant dense<0.000000e+00> : vector<16x4xf32>
    %85 = tpu.matmul %83, %84, %cst_74 {dimension_numbers = #tpu.dot_dimension_numbers<[1], [0], [0], [1], [0, 0, 1, 1], [], []>} : vector<16x128xf32>, vector<128x4xf32>, vector<16x4xf32> -> vector<16x4xf32>
    %cst_75 = arith.constant dense<0.000000e+00> : vector<4xf32>
    %86 = vector.multi_reduction <add>, %85, %cst_75 [0] : vector<16x4xf32> to vector<4xf32>
    %87 = vector.shape_cast %86 : vector<4xf32> to vector<1x4xf32>
    %88 = arith.mulf %83, %83 : vector<16x128xf32>
    %c0_76 = arith.constant 0 : index
    %c0_77 = arith.constant 0 : index
    %89 = vector.load %arg8[%c0_76, %c0_77] : memref<128x4xf32, #tpu.memory_space<vmem>>, vector<128x4xf32>
    %cst_78 = arith.constant dense<0.000000e+00> : vector<16x4xf32>
    %90 = tpu.matmul %88, %89, %cst_78 {dimension_numbers = #tpu.dot_dimension_numbers<[1], [0], [0], [1], [0, 0, 1, 1], [], []>} : vector<16x128xf32>, vector<128x4xf32>, vector<16x4xf32> -> vector<16x4xf32>
    %cst_79 = arith.constant dense<0.000000e+00> : vector<4xf32>
    %91 = vector.multi_reduction <add>, %90, %cst_79 [0] : vector<16x4xf32> to vector<4xf32>
    %92 = vector.shape_cast %91 : vector<4xf32> to vector<1x4xf32>
    %cst_80 = arith.constant 0.001953125 : f32
    %93 = vector.broadcast %cst_80 : f32 to vector<1x4xf32>
    %94 = arith.mulf %87, %93 : vector<1x4xf32>
    %cst_81 = arith.constant 0.001953125 : f32
    %95 = vector.broadcast %cst_81 : f32 to vector<1x4xf32>
    %96 = arith.mulf %92, %95 : vector<1x4xf32>
    %97 = arith.mulf %94, %94 : vector<1x4xf32>
    %98 = arith.subf %96, %97 : vector<1x4xf32>
    %c0_82 = arith.constant 0 : index
    %c0_83 = arith.constant 0 : index
    %99 = vector.load %arg6[%c0_82, %c0_83] : memref<1x4xf32, #tpu.memory_space<vmem>>, vector<1x4xf32>
    %cst_84 = arith.constant 9.99999974E-6 : f32
    %100 = vector.broadcast %cst_84 : f32 to vector<1x4xf32>
    %101 = arith.addf %98, %100 : vector<1x4xf32>
    %102 = math.rsqrt %101 : vector<1x4xf32>
    %103 = arith.mulf %99, %102 : vector<1x4xf32>
    %c0_85 = arith.constant 0 : index
    %c0_86 = arith.constant 0 : index
    %104 = vector.load %arg7[%c0_85, %c0_86] : memref<1x4xf32, #tpu.memory_space<vmem>>, vector<1x4xf32>
    %105 = arith.mulf %94, %103 : vector<1x4xf32>
    %106 = arith.subf %104, %105 : vector<1x4xf32>
    %c0_87 = arith.constant 0 : index
    %c0_88 = arith.constant 0 : index
    %107 = vector.load %arg9[%c0_87, %c0_88] : memref<4x128xf32, #tpu.memory_space<vmem>>, vector<4x128xf32>
    %cst_89 = arith.constant dense<0.000000e+00> : vector<1x128xf32>
    %108 = tpu.matmul %103, %107, %cst_89 {dimension_numbers = #tpu.dot_dimension_numbers<[1], [0], [0], [1], [0, 0, 1, 1], [], []>} : vector<1x4xf32>, vector<4x128xf32>, vector<1x128xf32> -> vector<1x128xf32>
    %c0_90 = arith.constant 0 : index
    %c0_91 = arith.constant 0 : index
    %109 = vector.load %arg9[%c0_90, %c0_91] : memref<4x128xf32, #tpu.memory_space<vmem>>, vector<4x128xf32>
    %cst_92 = arith.constant dense<0.000000e+00> : vector<1x128xf32>
    %110 = tpu.matmul %106, %109, %cst_92 {dimension_numbers = #tpu.dot_dimension_numbers<[1], [0], [0], [1], [0, 0, 1, 1], [], []>} : vector<1x4xf32>, vector<4x128xf32>, vector<1x128xf32> -> vector<1x128xf32>
    %111 = vector.broadcast %108 : vector<1x128xf32> to vector<16x128xf32>
    %112 = arith.mulf %83, %111 : vector<16x128xf32>
    %113 = vector.broadcast %110 : vector<1x128xf32> to vector<16x128xf32>
    %114 = arith.addf %112, %113 : vector<16x128xf32>
    %115 = arith.addf %114, %0 : vector<16x128xf32>
    %cst_93 = arith.constant 0.000000e+00 : f32
    %116 = vector.broadcast %cst_93 : f32 to vector<16x128xf32>
    %117 = arith.maximumf %115, %116 : vector<16x128xf32>
    %c0_94 = arith.constant 0 : index
    %c0_95 = arith.constant 0 : index
    %118 = vector.load %arg10[%c0_94, %c0_95] : memref<16x128xf32, #tpu.memory_space<vmem>>, vector<16x128xf32>
    tpu.vector_store %arg10[%c0_94, %c0_95], %117 {strides = array<i32>} : memref<16x128xf32, #tpu.memory_space<vmem>>, vector<16x128xf32>,
    return
  }
  func.func @transform_0(%arg0: i32) -> (i32, i32) {
    %c0_i32 = arith.constant 0 : i32
    %c0_i32_0 = arith.constant 0 : i32
    %c0_i32_1 = arith.constant 0 : i32
    return %c0_i32, %c0_i32_0 : i32, i32
  }
  func.func @transform_1(%arg0: i32) -> (i32, i32, i32) {
    %c0_i32 = arith.constant 0 : i32
    %c0_i32_0 = arith.constant 0 : i32
    %c0_i32_1 = arith.constant 0 : i32
    %c0_i32_2 = arith.constant 0 : i32
    return %c0_i32, %c0_i32_0, %c0_i32_1 : i32, i32, i32
  }
  func.func @transform_2(%arg0: i32) -> (i32, i32, i32) {
    %c0_i32 = arith.constant 0 : i32
    %c0_i32_0 = arith.constant 0 : i32
    %c0_i32_1 = arith.constant 0 : i32
    %c0_i32_2 = arith.constant 0 : i32
    return %c0_i32, %c0_i32_0, %c0_i32_1 : i32, i32, i32
  }
  func.func @transform_3(%arg0: i32) -> (i32, i32) {
    %c0_i32 = arith.constant 0 : i32
    %c0_i32_0 = arith.constant 0 : i32
    %c0_i32_1 = arith.constant 0 : i32
    return %c0_i32, %c0_i32_0 : i32, i32
  }
  func.func @transform_4(%arg0: i32) -> (i32, i32) {
    %c0_i32 = arith.constant 0 : i32
    %c0_i32_0 = arith.constant 0 : i32
    %c0_i32_1 = arith.constant 0 : i32
    return %c0_i32, %c0_i32_0 : i32, i32
  }
  func.func @transform_5(%arg0: i32) -> (i32, i32) {
    %c0_i32 = arith.constant 0 : i32
    %c0_i32_0 = arith.constant 0 : i32
    %c0_i32_1 = arith.constant 0 : i32
    return %c0_i32, %c0_i32_0 : i32, i32
  }
  func.func @transform_6(%arg0: i32) -> (i32, i32) {
    %c0_i32 = arith.constant 0 : i32
    %c0_i32_0 = arith.constant 0 : i32
    %c0_i32_1 = arith.constant 0 : i32
    return %c0_i32, %c0_i32_0 : i32, i32
  }
  func.func @transform_7(%arg0: i32) -> (i32, i32) {
    %c0_i32 = arith.constant 0 : i32
    %c0_i32_0 = arith.constant 0 : i32
    %c0_i32_1 = arith.constant 0 : i32
    return %c0_i32, %c0_i32_0 : i32, i32
  }
  func.func @transform_8(%arg0: i32) -> (i32, i32) {
    %c0_i32 = arith.constant 0 : i32
    %c0_i32_0 = arith.constant 0 : i32
    %c0_i32_1 = arith.constant 0 : i32
    return %c0_i32, %c0_i32_0 : i32, i32
  }
  func.func @transform_9(%arg0: i32) -> (i32, i32) {
    %c0_i32 = arith.constant 0 : i32
    %c0_i32_0 = arith.constant 0 : i32
    %c0_i32_1 = arith.constant 0 : i32
    return %c0_i32, %c0_i32_0 : i32, i32
  }
}

</mosaic_0001>

<llo_original>
// kernel: tpu_custom_call.1
$region0: #{tpu_custom_call.1}
  #allocation0 [shape = 'u32[]', space=smem, size = 0x4, offset = 0x4, fixed_abs, tag = 'smem constant byte address 0x4 - core index']
  #allocation1 [shape = 'u32[144,128]{1,0:T(1,128)}', space=vmem, size = 0x12000, scoped, tag = 'internal scratch']
  #allocation2 [shape = 'f32[18,144]{1,0:T(8,128)}', space=vmem, size = 0x6000, scoped, tag = 'scratch operand']
  %s0 = inlined_call_operand.vmem [shape: f32[16,128], index: 0, kind: input, shape index: {}]
  %s1 = inlined_call_operand.hbm [shape: bf16[3,144,128], index: 1, kind: input, shape index: {}]
  %s2 = inlined_call_operand.hbm [shape: bf16[3,144,128], index: 2, kind: input, shape index: {}]
  %s3 = inlined_call_operand.vmem [shape: f32[1,4], index: 3, kind: input, shape index: {}]
  %s4 = inlined_call_operand.vmem [shape: f32[1,4], index: 4, kind: input, shape index: {}]
  %s5 = inlined_call_operand.vmem [shape: f32[1,4], index: 5, kind: input, shape index: {}]
  %s6 = inlined_call_operand.vmem [shape: f32[1,4], index: 6, kind: input, shape index: {}]
  %s7 = inlined_call_operand.vmem [shape: f32[128,4], index: 7, kind: input, shape index: {}]
  %s8 = inlined_call_operand.vmem [shape: f32[4,128], index: 8, kind: input, shape index: {}]
  %s9 = inlined_call_operand.hbm [shape: f32[16,128], index: 9, kind: output, shape index: {}]
  %s10 = sld [smem:[#allocation0]]
  $region54: #{tpu_custom_call.1} parent=0
    _
  %s12 = ssub.s32 1, %s10
  %s13 = scalar_select 0, %s12, %s10
  $region1: #{tpu_custom_call.1} parent=0
    #allocation3 [shape = 'u8[110592]{0}', space=vmem, size = 0x1b000, scoped, tag = 'input window, operand 1, single buffered']
    #allocation4 [shape = 's32[1]{0}', space=sflag, size = 0x4, scoped, tag = 'scoped memory for tpu_custom_call.1']
    #allocation5 [shape = 's32[1]{0}', space=sflag, size = 0x4, scoped, tag = 'scoped memory for tpu_custom_call.1']
    #allocation6 [shape = 'u8[110592]{0}', space=vmem, size = 0x1b000, scoped, tag = 'input window, operand 2, single buffered']
    #allocation7 [shape = 's32[1]{0}', space=sflag, size = 0x4, scoped, tag = 'scoped memory for tpu_custom_call.1']
    #allocation8 [shape = 'u8[8192]{0}', space=vmem, size = 0x2000, scoped, tag = 'output window, operand 0, single buffered']
    %14 = vsyncpa [#allocation4], 0
    %15 = vsyncpa [#allocation7], 0
    %16 = vsyncpa [#allocation5], 0
    // Predicated region
    $region2: #{tpu_custom_call.1} parent=1 // pred_check
      _
    $region3: #{tpu_custom_call.1} parent=1 // pred_check_branch
      %18 = sbr.rel (0) target = $region5
    $region4: #{tpu_custom_call.1} parent=1 // pred_region
      _
    $region5: #{tpu_custom_call.1} parent=1 // pred_fallthru
      _
    // Predicated region
    $region6: #{tpu_custom_call.1} parent=1 // pred_check
      _
    $region7: #{tpu_custom_call.1} parent=1 // pred_check_branch
      %20 = sbr.rel (0) target = $region9
    $region8: #{tpu_custom_call.1} parent=1 // pred_region
      %s22 = ssub.s32 3456, 3456
      %23 = vsyncadd [#allocation4], %s22
      %s24 = sshll.u32 [#allocation3], 4
      %s25 = int_to_ptr.vmem [resolvable:$true] %s24
      %30 = dma.hbm_to_vmem [thread:$0]  %s1, 3456, %s25, [#allocation4], 64, 64, 4
    $region9: #{tpu_custom_call.1} parent=1 // pred_fallthru
      _
    // Predicated region
    $region10: #{tpu_custom_call.1} parent=1 // pred_check
      _
    $region11: #{tpu_custom_call.1} parent=1 // pred_check_branch
      %32 = sbr.rel (0) target = $region13
    $region12: #{tpu_custom_call.1} parent=1 // pred_region
      %s34 = ssub.s32 3456, 3456
      %35 = vsyncadd [#allocation7], %s34
      %s36 = sshll.u32 [#allocation6], 4
      %s37 = int_to_ptr.vmem [resolvable:$true] %s36
      %42 = dma.hbm_to_vmem [thread:$0]  %s2, 3456, %s37, [#allocation7], 64, 64, 4
    $region13: #{tpu_custom_call.1} parent=1 // pred_fallthru
      _
    // Predicated region
    $region14: #{tpu_custom_call.1} parent=1 // pred_check
      _
    $region15: #{tpu_custom_call.1} parent=1 // pred_check_branch
      %44 = sbr.rel (0) target = $region17
    $region16: #{tpu_custom_call.1} parent=1 // pred_region
      _
    $region17: #{tpu_custom_call.1} parent=1 // pred_fallthru
      _
    // Predicated region
    $region18: #{tpu_custom_call.1} parent=1 // pred_check
      _
    $region19: #{tpu_custom_call.1} parent=1 // pred_check_branch
      %46 = sbr.rel (0) target = $region21
    $region20: #{tpu_custom_call.1} parent=1 // pred_region
      _
    $region21: #{tpu_custom_call.1} parent=1 // pred_fallthru
      _
    // Predicated region
    $region22: #{tpu_custom_call.1} parent=1 // pred_check
      _
    $region23: #{tpu_custom_call.1} parent=1 // pred_check_branch
      %48 = sbr.rel (0) target = $region25
    $region24: #{tpu_custom_call.1} parent=1 // pred_region
      _
    $region25: #{tpu_custom_call.1} parent=1 // pred_fallthru
      _
    // Predicated region
    $region26: #{tpu_custom_call.1} parent=1 // pred_check
      _
    $region27: #{tpu_custom_call.1} parent=1 // pred_check_branch
      %50 = sbr.rel (0) target = $region29
    $region28: #{tpu_custom_call.1} parent=1 // pred_region
      _
    $region29: #{tpu_custom_call.1} parent=1 // pred_fallthru
      _
    // Predicated region
    $region30: #{tpu_custom_call.1} parent=1 // pred_check
      _
    $region31: #{tpu_custom_call.1} parent=1 // pred_check_branch
      %52 = sbr.rel (0) target = $region33
    $region32: #{tpu_custom_call.1} parent=1 // pred_region
      _
    $region33: #{tpu_custom_call.1} parent=1 // pred_fallthru
      _
    // Predicated region
    $region34: #{tpu_custom_call.1} parent=1 // pred_check
      _
    $region35: #{tpu_custom_call.1} parent=1 // pred_check_branch
      %54 = sbr.rel (0) target = $region37
    $region36: #{tpu_custom_call.1} parent=1 // pred_region
      _
    $region37: #{tpu_custom_call.1} parent=1 // pred_fallthru
      _
    // Predicated region
    $region38: #{tpu_custom_call.1} parent=1 // pred_check
      _
    $region39: #{tpu_custom_call.1} parent=1 // pred_check_branch
      %56 = sbr.rel (0) target = $region41
    $region40: #{tpu_custom_call.1} parent=1 // pred_region
      %57 = dma.done [#allocation4], 3456
    $region41: #{tpu_custom_call.1} parent=1 // pred_fallthru
      _
    // Predicated region
    $region42: #{tpu_custom_call.1} parent=1 // pred_check
      _
    $region43: #{tpu_custom_call.1} parent=1 // pred_check_branch
      %59 = sbr.rel (0) target = $region45
    $region44: #{tpu_custom_call.1} parent=1 // pred_region
      %60 = dma.done [#allocation7], 3456
    $region45: #{tpu_custom_call.1} parent=1 // pred_fallthru
      _
    %v62 = vld [vmem:[%s0] sm:$0xff]
    %v63 = vld [vmem:[%s0 + $0x8] sm:$0xff]
    %v64 = vlaneseq
    %vm65 = vcmp.ge.s32.totalorder %v64, 0
    %vm66 = vcmp.lt.s32.totalorder %v64, 144
    %vm67 = vmand %vm65, %vm66
    %68 = vst.msk [vmem:[#allocation2] ss:$8 sm:$0x3] %vm67, 0.0
    %69 = vst.msk [vmem:[#allocation2] ss:$8 sm:$0x0] %vm67, 0.0
    %s70 = scalar_lea.vmem [#allocation2], 33
    %71 = vst.msk [vmem:[%s70] ss:$8 sm:$0x3] %vm67, 0.0
    %72 = vst.msk [vmem:[%s70] ss:$8 sm:$0x0] %vm67, 0.0
    %vm73 = vcmask 31745
    %74 = vst.msk [vmem:[#allocation2] sm:$0xfe] %vm73, 0.0
    %vm75 = vcmask 31744
    %76 = vst.msk [vmem:[#allocation2 + $0x10] sm:$0xff] %vm75, 0.0
    %vm77 = vcmask 24576
    %78 = vst.msk [vmem:[#allocation2 + $0x20] sm:$0x1] %vm77, 0.0
    %vm79 = vcmask 589345
    %80 = vst.msk [vmem:[#allocation2] sm:$0xfe] %vm79, 0.0
    %vm81 = vcmask 589344
    %82 = vst.msk [vmem:[#allocation2 + $0x10] sm:$0xff] %vm81, 0.0
    %vm83 = vcmask 582176
    %84 = vst.msk [vmem:[#allocation2 + $0x20] sm:$0x1] %vm83, 0.0
    %vm87 = vcmask 1040384
    %v88 = vrot.slane %v62, 7
    %v89 = vrot.slane %v63, 7
    %v90 = vsel %vm87, %v88, %v89
    %91 = vrot.lane.b32.xlu0 %v88, 4
    %v92 = vpop.permute.xlu0 %91
    %93 = vrot.lane.b32.xlu0 %v90, 4
    %v94 = vpop.permute.xlu0 %93
    %95 = vrot.lane.b32.xlu0 %v89, 4
    %v96 = vpop.permute.xlu0 %95
    %vm100 = vcmask 556065
    %101 = vst.msk [vmem:[#allocation2] sm:$0xfe] %vm100, %v92
    %vm102 = vcmask 556064
    %103 = vst.msk [vmem:[#allocation2 + $0x10] sm:$0xff] %vm102, %v94
    %vm104 = vcmask 548896
    %105 = vst.msk [vmem:[#allocation2 + $0x20] sm:$0x1] %vm104, %v96
    %vm106 = vcmask 622145
    %107 = vst.msk [vmem:[#allocation2] sm:$0xfe] %vm106, 0.0
    %vm108 = vcmask 622144
    %109 = vst.msk [vmem:[#allocation2 + $0x10] sm:$0xff] %vm108, 0.0
    %vm110 = vcmask 614976
    %111 = vst.msk [vmem:[#allocation2 + $0x20] sm:$0x1] %vm110, 0.0
    %vm112 = vcmask 130145
    %113 = vst.msk [vmem:[#allocation2 + $0x8] sm:$0xfe] %vm112, 0.0
    %vm114 = vcmask 130144
    %115 = vst.msk [vmem:[#allocation2 + $0x18] sm:$0xff] %vm114, 0.0
    %vm116 = vcmask 122976
    %117 = vst.msk [vmem:[#allocation2 + $0x28] sm:$0x1] %vm116, 0.0
    %118 = vrot.lane.b32.xlu0 %v88, 12
    %v119 = vpop.permute.xlu0 %118
    %120 = vrot.lane.b32.xlu0 %v90, 12
    %v121 = vpop.permute.xlu0 %120
    %122 = vrot.lane.b32.xlu0 %v89, 12
    %v123 = vpop.permute.xlu0 %122
    %vm127 = vcmask 1048161
    %128 = vst.msk [vmem:[#allocation2] sm:$0xfe] %vm127, %v119
    %vm129 = vcmask 97281
    %130 = vst.msk [vmem:[#allocation2 + $0x8] sm:$0xfe] %vm129, %v119
    %vm131 = vcmask 1048160
    %132 = vst.msk [vmem:[#allocation2 + $0x10] sm:$0xff] %vm131, %v121
    %vm133 = vcmask 97280
    %134 = vst.msk [vmem:[#allocation2 + $0x18] sm:$0xff] %vm133, %v121
    %vm135 = vcmask 1040992
    %136 = vst.msk [vmem:[#allocation2 + $0x20] sm:$0x1] %vm135, %v123
    %vm137 = vcmask 90112
    %138 = vst.msk [vmem:[#allocation2 + $0x28] sm:$0x1] %vm137, %v123
    %v139 = vld [vmem:[#allocation2] sm:$0xff]
    %v140 = vld [vmem:[#allocation2 + $0x8] sm:$0xff]
    %v141 = vld [vmem:[#allocation2 + $0x10] sm:$0xff]
    %v142 = vld [vmem:[#allocation2 + $0x18] sm:$0xff]
    %v143 = vpack.c.bf16 %v141, %v139
    %v144 = vpack.c.bf16 %v142, %v140
    %v145 = vld [vmem:[#allocation3] sm:$0xf]
    %v146 = vld [vmem:[#allocation3 + $0x4] sm:$0xf]
    %v147 = vld [vmem:[#allocation3 + $0x8] sm:$0xf]
    %v148 = vld [vmem:[#allocation3 + $0xc] sm:$0xf]
    %v149 = vld [vmem:[#allocation3 + $0x10] sm:$0xf]
    %v150 = vld [vmem:[#allocation3 + $0x14] sm:$0xf]
    %v151 = vld [vmem:[#allocation3 + $0x18] sm:$0xf]
    %v152 = vld [vmem:[#allocation3 + $0x1c] sm:$0xf]
    %v153 = vld [vmem:[#allocation3 + $0x20] sm:$0xf]
    %v154 = vld [vmem:[#allocation3 + $0x24] sm:$0xf]
    %v155 = vld [vmem:[#allocation3 + $0x28] sm:$0xf]
    %v156 = vld [vmem:[#allocation3 + $0x2c] sm:$0xf]
    %v157 = vld [vmem:[#allocation3 + $0x30] sm:$0xf]
    %v158 = vld [vmem:[#allocation3 + $0x34] sm:$0xf]
    %v159 = vld [vmem:[#allocation3 + $0x38] sm:$0xf]
    %v160 = vld [vmem:[#allocation3 + $0x3c] sm:$0xf]
    %v161 = vld [vmem:[#allocation3 + $0x40] sm:$0xf]
    %v162 = vld [vmem:[#allocation3 + $0x44] sm:$0xf]
    %v163 = vld [vmem:[#allocation2] sm:$0xfe]
    %v164 = vld [vmem:[#allocation2 + $0x8] sm:$0xfe]
    %v165 = vld [vmem:[#allocation2 + $0x20] sm:$0x1]
    %v166 = vld [vmem:[#allocation2 + $0x28] sm:$0x1]
    %v167 = vpack.c.bf16 %v141, %v163
    %v168 = vpack.c.bf16 %v142, %v164
    %v169 = vpack.c.bf16 %v165, %v165
    %v170 = vpack.c.bf16 %v166, %v166
    %s171 = scalar_lea.vmem [#allocation3], 72
    %v172 = vld [vmem:[%s171] sm:$0xf]
    %v173 = vld [vmem:[%s171 + $0x4] sm:$0xf]
    %v174 = vld [vmem:[%s171 + $0x8] sm:$0xf]
    %v175 = vld [vmem:[%s171 + $0xc] sm:$0xf]
    %v176 = vld [vmem:[%s171 + $0x10] sm:$0xf]
    %v177 = vld [vmem:[%s171 + $0x14] sm:$0xf]
    %v178 = vld [vmem:[%s171 + $0x18] sm:$0xf]
    %v179 = vld [vmem:[%s171 + $0x1c] sm:$0xf]
    %v180 = vld [vmem:[%s171 + $0x20] sm:$0xf]
    %v181 = vld [vmem:[%s171 + $0x24] sm:$0xf]
    %v182 = vld [vmem:[%s171 + $0x28] sm:$0xf]
    %v183 = vld [vmem:[%s171 + $0x2c] sm:$0xf]
    %v184 = vld [vmem:[%s171 + $0x30] sm:$0xf]
    %v185 = vld [vmem:[%s171 + $0x34] sm:$0xf]
    %v186 = vld [vmem:[%s171 + $0x38] sm:$0xf]
    %v187 = vld [vmem:[%s171 + $0x3c] sm:$0xf]
    %v188 = vld [vmem:[%s171 + $0x40] sm:$0xf]
    %v189 = vld [vmem:[%s171 + $0x44] sm:$0xf]
    %vm190 = vsmask.f32 7424
    %v192 = vshrl.u32 %v167, 16
    %v194 = vshll.u32 %v167, 16
    %v196 = vrot.slane %v194, 1
    %v197 = vor.u32 %v192, %v196
    %v199 = vshll.u32 %v169, 16
    %v201 = vrot.slane %v199, 1
    %v202 = vsel %vm190, %v197, %v201
    %v204 = vshrl.u32 %v168, 16
    %v206 = vshll.u32 %v168, 16
    %v208 = vrot.slane %v206, 1
    %v209 = vor.u32 %v204, %v208
    %v211 = vshll.u32 %v170, 16
    %v213 = vrot.slane %v211, 1
    %v214 = vsel %vm190, %v209, %v213
    %v234 = vunpack.c.l.b16 %v172
    %v235 = vunpack.c.l.b16 %v173
    %v236 = vunpack.c.l.b16 %v174
    %v237 = vunpack.c.l.b16 %v175
    %v238 = vunpack.c.l.b16 %v176
    %v239 = vunpack.c.l.b16 %v177
    %v240 = vunpack.c.l.b16 %v178
    %v241 = vunpack.c.l.b16 %v179
    %v242 = vunpack.c.l.b16 %v180
    %v243 = vunpack.c.l.b16 %v181
    %v244 = vunpack.c.l.b16 %v182
    %v245 = vunpack.c.l.b16 %v183
    %v246 = vunpack.c.l.b16 %v184
    %v247 = vunpack.c.l.b16 %v185
    %v248 = vunpack.c.l.b16 %v186
    %v249 = vunpack.c.l.b16 %v187
    %v250 = vunpack.c.l.b16 %v188
    %v251 = vunpack.c.l.b16 %v189
    %v252 = vpack.c.b16 %v235, %v234
    %v253 = vpack.c.b16 %v237, %v236
    %v254 = vpack.c.b16 %v239, %v238
    %v255 = vpack.c.b16 %v241, %v240
    %v256 = vpack.c.b16 %v243, %v242
    %v257 = vpack.c.b16 %v245, %v244
    %v258 = vpack.c.b16 %v247, %v246
    %v259 = vpack.c.b16 %v249, %v248
    %v260 = vpack.c.b16 %v251, %v250
    %vm270 = vcmask 130048
    %v272 = vsel %vm270, %v214, 0
    %274 = vmatprep.subr.bf16.mxu0 0
    %275 = vmatpush1.bf16.msra.mxu0 %v252
    %276 = vmatprep.subr.bf16.mxu0 0
    %277 = vmatpush1.bf16.msra.mxu0 %v253
    %278 = vmatprep.subr.bf16.mxu0 0
    %279 = vmatpush1.bf16.msra.mxu0 %v254
    %280 = vmatprep.subr.bf16.mxu0 0
    %281 = vmatpush1.bf16.msra.mxu0 %v255
    %282 = vmatprep.subr.bf16.mxu0 0
    %283 = vmatpush1.bf16.msra.mxu0 %v256
    %284 = vmatprep.subr.bf16.mxu0 0
    %285 = vmatpush1.bf16.msra.mxu0 %v257
    %286 = vmatprep.subr.bf16.mxu0 0
    %287 = vmatpush1.bf16.msra.mxu0 %v258
    %288 = vmatprep.subr.bf16.mxu0 0
    %289 = vmatpush1.bf16.msra.mxu0 %v259
    %290 = vmatprep.subr.bf16.mxu0 0
    %291 = vmatpush1.bf16.msra.mxu0 %v260
    %292 = vmatprep.subr.bf16.mxu0 0
    %293 = vmatpush1.bf16.msra.mxu0 0
    %294 = vmatprep.subr.bf16.mxu0 0
    %295 = vmatpush1.bf16.msra.mxu0 0
    %296 = vmatprep.subr.bf16.mxu0 0
    %297 = vmatpush1.bf16.msra.mxu0 0
    %298 = vmatprep.subr.bf16.mxu0 0
    %299 = vmatpush1.bf16.msra.mxu0 0
    %300 = vmatprep.subr.bf16.mxu0 0
    %301 = vmatpush1.bf16.msra.mxu0 0
    %302 = vmatprep.subr.bf16.mxu0 0
    %303 = vmatpush1.bf16.msra.mxu0 0
    %304 = vmatprep.subr.bf16.mxu0 0
    %305 = vmatpush1.bf16.msra.mxu0 0
    %306 = vmatprep.mubr.bf16.mxu0 %v272
    %307 = vmatmul.mubr.bf16.gmra.mrb[0].mxu0 %v202
    %v308 = vpop.f32.mrb[0].mxu0
    %v309 = vadd.f32 0.0, %v308
    %v310 = vpop.f32.mrb[0].mxu0
    %v311 = vpop.f32.mrb[0].mxu0
    %v312 = vadd.f32 0.0, %v311
    %v313 = vpop.f32.mrb[0].mxu0
    %314 = vdwg.mxu0
    %v333 = vunpack.c.l.b16 %v145
    %v334 = vunpack.c.l.b16 %v146
    %v335 = vunpack.c.l.b16 %v147
    %v336 = vunpack.c.l.b16 %v148
    %v337 = vunpack.c.l.b16 %v149
    %v338 = vunpack.c.l.b16 %v150
    %v339 = vunpack.c.l.b16 %v151
    %v340 = vunpack.c.l.b16 %v152
    %v341 = vunpack.c.l.b16 %v153
    %v342 = vunpack.c.l.b16 %v154
    %v343 = vunpack.c.l.b16 %v155
    %v344 = vunpack.c.l.b16 %v156
    %v345 = vunpack.c.l.b16 %v157
    %v346 = vunpack.c.l.b16 %v158
    %v347 = vunpack.c.l.b16 %v159
    %v348 = vunpack.c.l.b16 %v160
    %v349 = vunpack.c.l.b16 %v161
    %v350 = vunpack.c.l.b16 %v162
    %v351 = vpack.c.b16 %v334, %v333
    %v352 = vpack.c.b16 %v336, %v335
    %v353 = vpack.c.b16 %v338, %v337
    %v354 = vpack.c.b16 %v340, %v339
    %v355 = vpack.c.b16 %v342, %v341
    %v356 = vpack.c.b16 %v344, %v343
    %v357 = vpack.c.b16 %v346, %v345
    %v358 = vpack.c.b16 %v348, %v347
    %v359 = vpack.c.b16 %v350, %v349
    %v370 = vsel %vm270, %v144, 0
    %372 = vmatprep.subr.bf16.mxu0 0
    %373 = vmatpush1.bf16.msra.mxu0 %v351
    %374 = vmatprep.subr.bf16.mxu0 0
    %375 = vmatpush1.bf16.msra.mxu0 %v352
    %376 = vmatprep.subr.bf16.mxu0 0
    %377 = vmatpush1.bf16.msra.mxu0 %v353
    %378 = vmatprep.subr.bf16.mxu0 0
    %379 = vmatpush1.bf16.msra.mxu0 %v354
    %380 = vmatprep.subr.bf16.mxu0 0
    %381 = vmatpush1.bf16.msra.mxu0 %v355
    %382 = vmatprep.subr.bf16.mxu0 0
    %383 = vmatpush1.bf16.msra.mxu0 %v356
    %384 = vmatprep.subr.bf16.mxu0 0
    %385 = vmatpush1.bf16.msra.mxu0 %v357
    %386 = vmatprep.subr.bf16.mxu0 0
    %387 = vmatpush1.bf16.msra.mxu0 %v358
    %388 = vmatprep.subr.bf16.mxu0 0
    %389 = vmatpush1.bf16.msra.mxu0 %v359
    %390 = vmatprep.subr.bf16.mxu0 0
    %391 = vmatpush1.bf16.msra.mxu0 0
    %392 = vmatprep.subr.bf16.mxu0 0
    %393 = vmatpush1.bf16.msra.mxu0 0
    %394 = vmatprep.subr.bf16.mxu0 0
    %395 = vmatpush1.bf16.msra.mxu0 0
    %396 = vmatprep.subr.bf16.mxu0 0
    %397 = vmatpush1.bf16.msra.mxu0 0
    %398 = vmatprep.subr.bf16.mxu0 0
    %399 = vmatpush1.bf16.msra.mxu0 0
    %400 = vmatprep.subr.bf16.mxu0 0
    %401 = vmatpush1.bf16.msra.mxu0 0
    %402 = vmatprep.subr.bf16.mxu0 0
    %403 = vmatpush1.bf16.msra.mxu0 0
    %404 = vmatprep.mubr.bf16.mxu0 %v370
    %405 = vmatmul.mubr.bf16.gmra.mrb[0].mxu0 %v143
    %v406 = vpop.f32.mrb[0].mxu0
    %v407 = vadd.f32 %v309, %v406
    %v408 = vpop.f32.mrb[0].mxu0
    %v409 = vpop.f32.mrb[0].mxu0
    %v410 = vadd.f32 %v312, %v409
    %v411 = vpop.f32.mrb[0].mxu0
    %412 = vdwg.mxu0
    %v413 = vld [vmem:[#allocation2] sm:$0xfc]
    %v414 = vld [vmem:[#allocation2 + $0x8] sm:$0xfc]
    %v415 = vld [vmem:[#allocation2 + $0x20] sm:$0x3]
    %v416 = vld [vmem:[#allocation2 + $0x28] sm:$0x3]
    %v417 = vpack.c.bf16 %v141, %v413
    %v418 = vpack.c.bf16 %v142, %v414
    %v419 = vpack.c.bf16 %v415, %v415
    %v420 = vpack.c.bf16 %v416, %v416
    %s421 = scalar_lea.vmem [#allocation3], 144
    %v422 = vld [vmem:[%s421] sm:$0xf]
    %v423 = vld [vmem:[%s421 + $0x4] sm:$0xf]
    %v424 = vld [vmem:[%s421 + $0x8] sm:$0xf]
    %v425 = vld [vmem:[%s421 + $0xc] sm:$0xf]
    %v426 = vld [vmem:[%s421 + $0x10] sm:$0xf]
    %v427 = vld [vmem:[%s421 + $0x14] sm:$0xf]
    %v428 = vld [vmem:[%s421 + $0x18] sm:$0xf]
    %v429 = vld [vmem:[%s421 + $0x1c] sm:$0xf]
    %v430 = vld [vmem:[%s421 + $0x20] sm:$0xf]
    %v431 = vld [vmem:[%s421 + $0x24] sm:$0xf]
    %v432 = vld [vmem:[%s421 + $0x28] sm:$0xf]
    %v433 = vld [vmem:[%s421 + $0x2c] sm:$0xf]
    %v434 = vld [vmem:[%s421 + $0x30] sm:$0xf]
    %v435 = vld [vmem:[%s421 + $0x34] sm:$0xf]
    %v436 = vld [vmem:[%s421 + $0x38] sm:$0xf]
    %v437 = vld [vmem:[%s421 + $0x3c] sm:$0xf]
    %v438 = vld [vmem:[%s421 + $0x40] sm:$0xf]
    %v439 = vld [vmem:[%s421 + $0x44] sm:$0xf]
    %vm444 = vcmask 1046528
    %v445 = vrot.slane %v417, 1
    %v446 = vrot.slane %v419, 1
    %v447 = vsel %vm444, %v445, %v446
    %v448 = vrot.slane %v418, 1
    %v449 = vrot.slane %v420, 1
    %v450 = vsel %vm444, %v448, %v449
    %v470 = vunpack.c.l.b16 %v422
    %v471 = vunpack.c.l.b16 %v423
    %v472 = vunpack.c.l.b16 %v424
    %v473 = vunpack.c.l.b16 %v425
    %v474 = vunpack.c.l.b16 %v426
    %v475 = vunpack.c.l.b16 %v427
    %v476 = vunpack.c.l.b16 %v428
    %v477 = vunpack.c.l.b16 %v429
    %v478 = vunpack.c.l.b16 %v430
    %v479 = vunpack.c.l.b16 %v431
    %v480 = vunpack.c.l.b16 %v432
    %v481 = vunpack.c.l.b16 %v433
    %v482 = vunpack.c.l.b16 %v434
    %v483 = vunpack.c.l.b16 %v435
    %v484 = vunpack.c.l.b16 %v436
    %v485 = vunpack.c.l.b16 %v437
    %v486 = vunpack.c.l.b16 %v438
    %v487 = vunpack.c.l.b16 %v439
    %v488 = vpack.c.b16 %v471, %v470
    %v489 = vpack.c.b16 %v473, %v472
    %v490 = vpack.c.b16 %v475, %v474
    %v491 = vpack.c.b16 %v477, %v476
    %v492 = vpack.c.b16 %v479, %v478
    %v493 = vpack.c.b16 %v481, %v480
    %v494 = vpack.c.b16 %v483, %v482
    %v495 = vpack.c.b16 %v485, %v484
    %v496 = vpack.c.b16 %v487, %v486
    %v507 = vsel %vm270, %v450, 0
    %509 = vmatprep.subr.bf16.mxu0 0
    %510 = vmatpush1.bf16.msra.mxu0 %v488
    %511 = vmatprep.subr.bf16.mxu0 0
    %512 = vmatpush1.bf16.msra.mxu0 %v489
    %513 = vmatprep.subr.bf16.mxu0 0
    %514 = vmatpush1.bf16.msra.mxu0 %v490
    %515 = vmatprep.subr.bf16.mxu0 0
    %516 = vmatpush1.bf16.msra.mxu0 %v491
    %517 = vmatprep.subr.bf16.mxu0 0
    %518 = vmatpush1.bf16.msra.mxu0 %v492
    %519 = vmatprep.subr.bf16.mxu0 0
    %520 = vmatpush1.bf16.msra.mxu0 %v493
    %521 = vmatprep.subr.bf16.mxu0 0
    %522 = vmatpush1.bf16.msra.mxu0 %v494
    %523 = vmatprep.subr.bf16.mxu0 0
    %524 = vmatpush1.bf16.msra.mxu0 %v495
    %525 = vmatprep.subr.bf16.mxu0 0
    %526 = vmatpush1.bf16.msra.mxu0 %v496
    %527 = vmatprep.subr.bf16.mxu0 0
    %528 = vmatpush1.bf16.msra.mxu0 0
    %529 = vmatprep.subr.bf16.mxu0 0
    %530 = vmatpush1.bf16.msra.mxu0 0
    %531 = vmatprep.subr.bf16.mxu0 0
    %532 = vmatpush1.bf16.msra.mxu0 0
    %533 = vmatprep.subr.bf16.mxu0 0
    %534 = vmatpush1.bf16.msra.mxu0 0
    %535 = vmatprep.subr.bf16.mxu0 0
    %536 = vmatpush1.bf16.msra.mxu0 0
    %537 = vmatprep.subr.bf16.mxu0 0
    %538 = vmatpush1.bf16.msra.mxu0 0
    %539 = vmatprep.subr.bf16.mxu0 0
    %540 = vmatpush1.bf16.msra.mxu0 0
    %541 = vmatprep.mubr.bf16.mxu0 %v507
    %542 = vmatmul.mubr.bf16.gmra.mrb[0].mxu0 %v447
    %v543 = vpop.f32.mrb[0].mxu0
    %v544 = vadd.f32 0.0, %v543
    %v545 = vpop.f32.mrb[0].mxu0
    %v546 = vpop.f32.mrb[0].mxu0
    %v547 = vadd.f32 0.0, %v546
    %v548 = vpop.f32.mrb[0].mxu0
    %549 = vdwg.mxu0
    %v550 = vadd.f32 %v407, %v544
    %v551 = vadd.f32 %v410, %v547
    %v552 = vld [vmem:[%s7] sm:$0xff]
    %v553 = vld [vmem:[%s7 + $0x8] sm:$0xff]
    %v554 = vld [vmem:[%s7 + $0x10] sm:$0xff]
    %v555 = vld [vmem:[%s7 + $0x18] sm:$0xff]
    %v556 = vld [vmem:[%s7 + $0x20] sm:$0xff]
    %v557 = vld [vmem:[%s7 + $0x28] sm:$0xff]
    %v558 = vld [vmem:[%s7 + $0x30] sm:$0xff]
    %v559 = vld [vmem:[%s7 + $0x38] sm:$0xff]
    %v560 = vld [vmem:[%s7 + $0x40] sm:$0xff]
    %v561 = vld [vmem:[%s7 + $0x48] sm:$0xff]
    %v562 = vld [vmem:[%s7 + $0x50] sm:$0xff]
    %v563 = vld [vmem:[%s7 + $0x58] sm:$0xff]
    %v564 = vld [vmem:[%s7 + $0x60] sm:$0xff]
    %v565 = vld [vmem:[%s7 + $0x68] sm:$0xff]
    %v566 = vld [vmem:[%s7 + $0x70] sm:$0xff]
    %v567 = vld [vmem:[%s7 + $0x78] sm:$0xff]
    %568 = vmatprep.subr.mxu0 0.0
    %569 = vmatpush1.msra.mxu0 %v552
    %570 = vmatprep.subr.mxu0 0.0
    %571 = vmatpush1.msra.mxu0 %v553
    %572 = vmatprep.subr.mxu0 0.0
    %573 = vmatpush1.msra.mxu0 %v554
    %574 = vmatprep.subr.mxu0 0.0
    %575 = vmatpush1.msra.mxu0 %v555
    %576 = vmatprep.subr.mxu0 0.0
    %577 = vmatpush1.msra.mxu0 %v556
    %578 = vmatprep.subr.mxu0 0.0
    %579 = vmatpush1.msra.mxu0 %v557
    %580 = vmatprep.subr.mxu0 0.0
    %581 = vmatpush1.msra.mxu0 %v558
    %582 = vmatprep.subr.mxu0 0.0
    %583 = vmatpush1.msra.mxu0 %v559
    %584 = vmatprep.subr.mxu0 0.0
    %585 = vmatpush1.msra.mxu0 %v560
    %586 = vmatprep.subr.mxu0 0.0
    %587 = vmatpush1.msra.mxu0 %v561
    %588 = vmatprep.subr.mxu0 0.0
    %589 = vmatpush1.msra.mxu0 %v562
    %590 = vmatprep.subr.mxu0 0.0
    %591 = vmatpush1.msra.mxu0 %v563
    %592 = vmatprep.subr.mxu0 0.0
    %593 = vmatpush1.msra.mxu0 %v564
    %594 = vmatprep.subr.mxu0 0.0
    %595 = vmatpush1.msra.mxu0 %v565
    %596 = vmatprep.subr.mxu0 0.0
    %597 = vmatpush1.msra.mxu0 %v566
    %598 = vmatprep.subr.mxu0 0.0
    %599 = vmatpush1.msra.mxu0 %v567
    %600 = vmatprep.subr.mxu0 0.0
    %601 = vmatpush1.msra.mxu0 0.0
    %602 = vmatprep.subr.mxu0 0.0
    %603 = vmatpush1.msra.mxu0 0.0
    %604 = vmatprep.subr.mxu0 0.0
    %605 = vmatpush1.msra.mxu0 0.0
    %606 = vmatprep.subr.mxu0 0.0
    %607 = vmatpush1.msra.mxu0 0.0
    %608 = vmatprep.subr.mxu0 0.0
    %609 = vmatpush1.msra.mxu0 0.0
    %610 = vmatprep.subr.mxu0 0.0
    %611 = vmatpush1.msra.mxu0 0.0
    %612 = vmatprep.subr.mxu0 0.0
    %613 = vmatpush1.msra.mxu0 0.0
    %614 = vmatprep.subr.mxu0 0.0
    %615 = vmatpush1.msra.mxu0 0.0
    %616 = vmatprep.subr.mxu0 0.0
    %617 = vmatpush1.msra.mxu0 0.0
    %618 = vmatprep.subr.mxu0 0.0
    %619 = vmatpush1.msra.mxu0 0.0
    %620 = vmatprep.subr.mxu0 0.0
    %621 = vmatpush1.msra.mxu0 0.0
    %622 = vmatprep.subr.mxu0 0.0
    %623 = vmatpush1.msra.mxu0 0.0
    %624 = vmatprep.subr.mxu0 0.0
    %625 = vmatpush1.msra.mxu0 0.0
    %626 = vmatprep.subr.mxu0 0.0
    %627 = vmatpush1.msra.mxu0 0.0
    %628 = vmatprep.subr.mxu0 0.0
    %629 = vmatpush1.msra.mxu0 0.0
    %630 = vmatprep.subr.mxu0 0.0
    %631 = vmatpush1.msra.mxu0 0.0
    %632 = vmatprep.mubr.f32.mxu0 0.0
    %633 = vmatmul.mubr.f32.gmra.mrb[0].mxu0 %v550
    %v634 = vpop.f32.mrb[0].mxu0
    %v635 = vadd.f32 0.0, %v634
    %v636 = vpop.f32.mrb[0].mxu0
    %637 = vmatprep.mubr.f32.mxu0 0.0
    %638 = vmatmul.mubr.f32.gmra.mrb[0].mxu0 %v551
    %v639 = vpop.f32.mrb[0].mxu0
    %v640 = vadd.f32 0.0, %v639
    %v641 = vpop.f32.mrb[0].mxu0
    %642 = vdwg.mxu0
    %v643 = vsel %vm75, %v635, 0.0
    %v644 = vsel %vm75, %v640, 0.0
    %v645 = vadd.f32 %v643, %v644
    %v646 = vrot.slane %v645, 4
    %v647 = vadd.f32 %v645, %v646
    %v648 = vrot.slane %v647, 2
    %v649 = vadd.f32 %v647, %v648
    %v650 = vrot.slane %v649, 1
    %v651 = vadd.f32 %v649, %v650
    %v652 = vmul.f32 %v550, %v550
    %v653 = vmul.f32 %v551, %v551
    %654 = vmatprep.subr.mxu0 0.0
    %655 = vmatpush1.msra.mxu0 %v552
    %656 = vmatprep.subr.mxu0 0.0
    %657 = vmatpush1.msra.mxu0 %v553
    %658 = vmatprep.subr.mxu0 0.0
    %659 = vmatpush1.msra.mxu0 %v554
    %660 = vmatprep.subr.mxu0 0.0
    %661 = vmatpush1.msra.mxu0 %v555
    %662 = vmatprep.subr.mxu0 0.0
    %663 = vmatpush1.msra.mxu0 %v556
    %664 = vmatprep.subr.mxu0 0.0
    %665 = vmatpush1.msra.mxu0 %v557
    %666 = vmatprep.subr.mxu0 0.0
    %667 = vmatpush1.msra.mxu0 %v558
    %668 = vmatprep.subr.mxu0 0.0
    %669 = vmatpush1.msra.mxu0 %v559
    %670 = vmatprep.subr.mxu0 0.0
    %671 = vmatpush1.msra.mxu0 %v560
    %672 = vmatprep.subr.mxu0 0.0
    %673 = vmatpush1.msra.mxu0 %v561
    %674 = vmatprep.subr.mxu0 0.0
    %675 = vmatpush1.msra.mxu0 %v562
    %676 = vmatprep.subr.mxu0 0.0
    %677 = vmatpush1.msra.mxu0 %v563
    %678 = vmatprep.subr.mxu0 0.0
    %679 = vmatpush1.msra.mxu0 %v564
    %680 = vmatprep.subr.mxu0 0.0
    %681 = vmatpush1.msra.mxu0 %v565
    %682 = vmatprep.subr.mxu0 0.0
    %683 = vmatpush1.msra.mxu0 %v566
    %684 = vmatprep.subr.mxu0 0.0
    %685 = vmatpush1.msra.mxu0 %v567
    %686 = vmatprep.subr.mxu0 0.0
    %687 = vmatpush1.msra.mxu0 0.0
    %688 = vmatprep.subr.mxu0 0.0
    %689 = vmatpush1.msra.mxu0 0.0
    %690 = vmatprep.subr.mxu0 0.0
    %691 = vmatpush1.msra.mxu0 0.0
    %692 = vmatprep.subr.mxu0 0.0
    %693 = vmatpush1.msra.mxu0 0.0
    %694 = vmatprep.subr.mxu0 0.0
    %695 = vmatpush1.msra.mxu0 0.0
    %696 = vmatprep.subr.mxu0 0.0
    %697 = vmatpush1.msra.mxu0 0.0
    %698 = vmatprep.subr.mxu0 0.0
    %699 = vmatpush1.msra.mxu0 0.0
    %700 = vmatprep.subr.mxu0 0.0
    %701 = vmatpush1.msra.mxu0 0.0
    %702 = vmatprep.subr.mxu0 0.0
    %703 = vmatpush1.msra.mxu0 0.0
    %704 = vmatprep.subr.mxu0 0.0
    %705 = vmatpush1.msra.mxu0 0.0
    %706 = vmatprep.subr.mxu0 0.0
    %707 = vmatpush1.msra.mxu0 0.0
    %708 = vmatprep.subr.mxu0 0.0
    %709 = vmatpush1.msra.mxu0 0.0
    %710 = vmatprep.subr.mxu0 0.0
    %711 = vmatpush1.msra.mxu0 0.0
    %712 = vmatprep.subr.mxu0 0.0
    %713 = vmatpush1.msra.mxu0 0.0
    %714 = vmatprep.subr.mxu0 0.0
    %715 = vmatpush1.msra.mxu0 0.0
    %716 = vmatprep.subr.mxu0 0.0
    %717 = vmatpush1.msra.mxu0 0.0
    %718 = vmatprep.mubr.f32.mxu0 0.0
    %719 = vmatmul.mubr.f32.gmra.mrb[0].mxu0 %v652
    %v720 = vpop.f32.mrb[0].mxu0
    %v721 = vadd.f32 0.0, %v720
    %v722 = vpop.f32.mrb[0].mxu0
    %723 = vmatprep.mubr.f32.mxu0 0.0
    %724 = vmatmul.mubr.f32.gmra.mrb[0].mxu0 %v653
    %v725 = vpop.f32.mrb[0].mxu0
    %v726 = vadd.f32 0.0, %v725
    %v727 = vpop.f32.mrb[0].mxu0
    %728 = vdwg.mxu0
    %v729 = vsel %vm75, %v721, 0.0
    %v730 = vsel %vm75, %v726, 0.0
    %v731 = vadd.f32 %v729, %v730
    %v732 = vrot.slane %v731, 4
    %v733 = vadd.f32 %v731, %v732
    %v734 = vrot.slane %v733, 2
    %v735 = vadd.f32 %v733, %v734
    %v736 = vrot.slane %v735, 1
    %v737 = vadd.f32 %v735, %v736
    %v738 = vmul.f32 %v651, 0.001953125
    %v739 = vmul.f32 %v737, 0.001953125
    %v740 = vmul.f32 %v738, %v738
    %v741 = vsub.f32 %v739, %v740
    %v742 = vld [vmem:[%s3] sm:$0x1]
    %v743 = vadd.f32 %v741, 1e-05
    %v744 = vrsqrt.pop %v743
    %v745 = vmul.f32 %v742, %v744
    %v746 = vld [vmem:[%s4] sm:$0x1]
    %v747 = vmul.f32 %v738, %v745
    %v748 = vsub.f32 %v746, %v747
    %v749 = vld [vmem:[%s8] sm:$0xf]
    %v751 = vsel %vm75, %v745, 0
    %vm753 = vcmask 1043456
    %v755 = vsel %vm753, %v749, 0
    %757 = vmatprep.subr.mxu0 0.0
    %758 = vmatpush1.msra.mxu0 %v755
    %759 = vmatprep.subr.mxu0 0.0
    %760 = vmatpush1.msra.mxu0 0.0
    %761 = vmatprep.subr.mxu0 0.0
    %762 = vmatpush1.msra.mxu0 0.0
    %763 = vmatprep.subr.mxu0 0.0
    %764 = vmatpush1.msra.mxu0 0.0
    %765 = vmatprep.subr.mxu0 0.0
    %766 = vmatpush1.msra.mxu0 0.0
    %767 = vmatprep.subr.mxu0 0.0
    %768 = vmatpush1.msra.mxu0 0.0
    %769 = vmatprep.subr.mxu0 0.0
    %770 = vmatpush1.msra.mxu0 0.0
    %771 = vmatprep.subr.mxu0 0.0
    %772 = vmatpush1.msra.mxu0 0.0
    %773 = vmatprep.subr.mxu0 0.0
    %774 = vmatpush1.msra.mxu0 0.0
    %775 = vmatprep.subr.mxu0 0.0
    %776 = vmatpush1.msra.mxu0 0.0
    %777 = vmatprep.subr.mxu0 0.0
    %778 = vmatpush1.msra.mxu0 0.0
    %779 = vmatprep.subr.mxu0 0.0
    %780 = vmatpush1.msra.mxu0 0.0
    %781 = vmatprep.subr.mxu0 0.0
    %782 = vmatpush1.msra.mxu0 0.0
    %783 = vmatprep.subr.mxu0 0.0
    %784 = vmatpush1.msra.mxu0 0.0
    %785 = vmatprep.subr.mxu0 0.0
    %786 = vmatpush1.msra.mxu0 0.0
    %787 = vmatprep.subr.mxu0 0.0
    %788 = vmatpush1.msra.mxu0 0.0
    %789 = vmatprep.subr.mxu0 0.0
    %790 = vmatpush1.msra.mxu0 0.0
    %791 = vmatprep.subr.mxu0 0.0
    %792 = vmatpush1.msra.mxu0 0.0
    %793 = vmatprep.subr.mxu0 0.0
    %794 = vmatpush1.msra.mxu0 0.0
    %795 = vmatprep.subr.mxu0 0.0
    %796 = vmatpush1.msra.mxu0 0.0
    %797 = vmatprep.subr.mxu0 0.0
    %798 = vmatpush1.msra.mxu0 0.0
    %799 = vmatprep.subr.mxu0 0.0
    %800 = vmatpush1.msra.mxu0 0.0
    %801 = vmatprep.subr.mxu0 0.0
    %802 = vmatpush1.msra.mxu0 0.0
    %803 = vmatprep.subr.mxu0 0.0
    %804 = vmatpush1.msra.mxu0 0.0
    %805 = vmatprep.subr.mxu0 0.0
    %806 = vmatpush1.msra.mxu0 0.0
    %807 = vmatprep.subr.mxu0 0.0
    %808 = vmatpush1.msra.mxu0 0.0
    %809 = vmatprep.subr.mxu0 0.0
    %810 = vmatpush1.msra.mxu0 0.0
    %811 = vmatprep.subr.mxu0 0.0
    %812 = vmatpush1.msra.mxu0 0.0
    %813 = vmatprep.subr.mxu0 0.0
    %814 = vmatpush1.msra.mxu0 0.0
    %815 = vmatprep.subr.mxu0 0.0
    %816 = vmatpush1.msra.mxu0 0.0
    %817 = vmatprep.subr.mxu0 0.0
    %818 = vmatpush1.msra.mxu0 0.0
    %819 = vmatprep.subr.mxu0 0.0
    %820 = vmatpush1.msra.mxu0 0.0
    %821 = vmatprep.mubr.f32.mxu0 0.0
    %822 = vmatmul.mubr.f32.gmra.mrb[0].mxu0 %v751
    %v823 = vpop.f32.mrb[0].mxu0
    %v824 = vadd.f32 0.0, %v823
    %v825 = vpop.f32.mrb[0].mxu0
    %826 = vdwg.mxu0
    %v828 = vsel %vm75, %v748, 0
    %830 = vmatprep.subr.mxu0 0.0
    %831 = vmatpush1.msra.mxu0 %v755
    %832 = vmatprep.subr.mxu0 0.0
    %833 = vmatpush1.msra.mxu0 0.0
    %834 = vmatprep.subr.mxu0 0.0
    %835 = vmatpush1.msra.mxu0 0.0
    %836 = vmatprep.subr.mxu0 0.0
    %837 = vmatpush1.msra.mxu0 0.0
    %838 = vmatprep.subr.mxu0 0.0
    %839 = vmatpush1.msra.mxu0 0.0
    %840 = vmatprep.subr.mxu0 0.0
    %841 = vmatpush1.msra.mxu0 0.0
    %842 = vmatprep.subr.mxu0 0.0
    %843 = vmatpush1.msra.mxu0 0.0
    %844 = vmatprep.subr.mxu0 0.0
    %845 = vmatpush1.msra.mxu0 0.0
    %846 = vmatprep.subr.mxu0 0.0
    %847 = vmatpush1.msra.mxu0 0.0
    %848 = vmatprep.subr.mxu0 0.0
    %849 = vmatpush1.msra.mxu0 0.0
    %850 = vmatprep.subr.mxu0 0.0
    %851 = vmatpush1.msra.mxu0 0.0
    %852 = vmatprep.subr.mxu0 0.0
    %853 = vmatpush1.msra.mxu0 0.0
    %854 = vmatprep.subr.mxu0 0.0
    %855 = vmatpush1.msra.mxu0 0.0
    %856 = vmatprep.subr.mxu0 0.0
    %857 = vmatpush1.msra.mxu0 0.0
    %858 = vmatprep.subr.mxu0 0.0
    %859 = vmatpush1.msra.mxu0 0.0
    %860 = vmatprep.subr.mxu0 0.0
    %861 = vmatpush1.msra.mxu0 0.0
    %862 = vmatprep.subr.mxu0 0.0
    %863 = vmatpush1.msra.mxu0 0.0
    %864 = vmatprep.subr.mxu0 0.0
    %865 = vmatpush1.msra.mxu0 0.0
    %866 = vmatprep.subr.mxu0 0.0
    %867 = vmatpush1.msra.mxu0 0.0
    %868 = vmatprep.subr.mxu0 0.0
    %869 = vmatpush1.msra.mxu0 0.0
    %870 = vmatprep.subr.mxu0 0.0
    %871 = vmatpush1.msra.mxu0 0.0
    %872 = vmatprep.subr.mxu0 0.0
    %873 = vmatpush1.msra.mxu0 0.0
    %874 = vmatprep.subr.mxu0 0.0
    %875 = vmatpush1.msra.mxu0 0.0
    %876 = vmatprep.subr.mxu0 0.0
    %877 = vmatpush1.msra.mxu0 0.0
    %878 = vmatprep.subr.mxu0 0.0
    %879 = vmatpush1.msra.mxu0 0.0
    %880 = vmatprep.subr.mxu0 0.0
    %881 = vmatpush1.msra.mxu0 0.0
    %882 = vmatprep.subr.mxu0 0.0
    %883 = vmatpush1.msra.mxu0 0.0
    %884 = vmatprep.subr.mxu0 0.0
    %885 = vmatpush1.msra.mxu0 0.0
    %886 = vmatprep.subr.mxu0 0.0
    %887 = vmatpush1.msra.mxu0 0.0
    %888 = vmatprep.subr.mxu0 0.0
    %889 = vmatpush1.msra.mxu0 0.0
    %890 = vmatprep.subr.mxu0 0.0
    %891 = vmatpush1.msra.mxu0 0.0
    %892 = vmatprep.subr.mxu0 0.0
    %893 = vmatpush1.msra.mxu0 0.0
    %894 = vmatprep.mubr.f32.mxu0 0.0
    %895 = vmatmul.mubr.f32.gmra.mrb[0].mxu0 %v828
    %v896 = vpop.f32.mrb[0].mxu0
    %v897 = vadd.f32 0.0, %v896
    %v898 = vpop.f32.mrb[0].mxu0
    %899 = vdwg.mxu0
    %v900 = vlaneseq
    %v901 = vshrl.u32 %v900, 7
    %v902 = vsub.s32 0, %v901
    %v903 = vrot.slane %v824, %v902
    %v904 = vmul.f32 %v550, %v903
    %v905 = vmul.f32 %v551, %v903
    %v906 = vlaneseq
    %v907 = vshrl.u32 %v906, 7
    %v908 = vsub.s32 0, %v907
    %v909 = vrot.slane %v897, %v908
    %v910 = vadd.f32 %v904, %v909
    %v911 = vadd.f32 %v905, %v909
    %v912 = vmax.f32 %v910, 0.0
    %v913 = vmax.f32 %v911, 0.0
    %v916 = vrot.slane %v912, 7
    %v917 = vrot.slane %v913, 7
    %v918 = vsel %vm87, %v916, %v917
    %919 = vrot.lane.b32.xlu0 %v916, 4
    %v920 = vpop.permute.xlu0 %919
    %921 = vrot.lane.b32.xlu0 %v918, 4
    %v922 = vpop.permute.xlu0 %921
    %923 = vrot.lane.b32.xlu0 %v917, 4
    %v924 = vpop.permute.xlu0 %923
    %928 = vst.msk [vmem:[#allocation2] sm:$0xfe] %vm100, %v920
    %929 = vst.msk [vmem:[#allocation2 + $0x10] sm:$0xff] %vm102, %v922
    %930 = vst.msk [vmem:[#allocation2 + $0x20] sm:$0x1] %vm104, %v924
    %931 = vrot.lane.b32.xlu0 %v916, 12
    %v932 = vpop.permute.xlu0 %931
    %933 = vrot.lane.b32.xlu0 %v918, 12
    %v934 = vpop.permute.xlu0 %933
    %935 = vrot.lane.b32.xlu0 %v917, 12
    %v936 = vpop.permute.xlu0 %935
    %940 = vst.msk [vmem:[#allocation2] sm:$0xfe] %vm127, %v932
    %941 = vst.msk [vmem:[#allocation2 + $0x8] sm:$0xfe] %vm129, %v932
    %942 = vst.msk [vmem:[#allocation2 + $0x10] sm:$0xff] %vm131, %v934
    %943 = vst.msk [vmem:[#allocation2 + $0x18] sm:$0xff] %vm133, %v934
    %944 = vst.msk [vmem:[#allocation2 + $0x20] sm:$0x1] %vm135, %v936
    %945 = vst.msk [vmem:[#allocation2 + $0x28] sm:$0x1] %vm137, %v936
    %v946 = vld [vmem:[#allocation2] sm:$0xff]
    %v947 = vld [vmem:[#allocation2 + $0x8] sm:$0xff]
    %v948 = vld [vmem:[#allocation2 + $0x10] sm:$0xff]
    %v949 = vld [vmem:[#allocation2 + $0x18] sm:$0xff]
    %v950 = vpack.c.bf16 %v948, %v946
    %v951 = vpack.c.bf16 %v949, %v947
    %v952 = vld [vmem:[#allocation6] sm:$0xf]
    %v953 = vld [vmem:[#allocation6 + $0x4] sm:$0xf]
    %v954 = vld [vmem:[#allocation6 + $0x8] sm:$0xf]
    %v955 = vld [vmem:[#allocation6 + $0xc] sm:$0xf]
    %v956 = vld [vmem:[#allocation6 + $0x10] sm:$0xf]
    %v957 = vld [vmem:[#allocation6 + $0x14] sm:$0xf]
    %v958 = vld [vmem:[#allocation6 + $0x18] sm:$0xf]
    %v959 = vld [vmem:[#allocation6 + $0x1c] sm:$0xf]
    %v960 = vld [vmem:[#allocation6 + $0x20] sm:$0xf]
    %v961 = vld [vmem:[#allocation6 + $0x24] sm:$0xf]
    %v962 = vld [vmem:[#allocation6 + $0x28] sm:$0xf]
    %v963 = vld [vmem:[#allocation6 + $0x2c] sm:$0xf]
    %v964 = vld [vmem:[#allocation6 + $0x30] sm:$0xf]
    %v965 = vld [vmem:[#allocation6 + $0x34] sm:$0xf]
    %v966 = vld [vmem:[#allocation6 + $0x38] sm:$0xf]
    %v967 = vld [vmem:[#allocation6 + $0x3c] sm:$0xf]
    %v968 = vld [vmem:[#allocation6 + $0x40] sm:$0xf]
    %v969 = vld [vmem:[#allocation6 + $0x44] sm:$0xf]
    %v970 = vld [vmem:[#allocation2] sm:$0xfe]
    %v971 = vld [vmem:[#allocation2 + $0x8] sm:$0xfe]
    %v972 = vld [vmem:[#allocation2 + $0x20] sm:$0x1]
    %v973 = vld [vmem:[#allocation2 + $0x28] sm:$0x1]
    %v974 = vpack.c.bf16 %v948, %v970
    %v975 = vpack.c.bf16 %v949, %v971
    %v976 = vpack.c.bf16 %v972, %v972
    %v977 = vpack.c.bf16 %v973, %v973
    %s978 = scalar_lea.vmem [#allocation6], 72
    %v979 = vld [vmem:[%s978] sm:$0xf]
    %v980 = vld [vmem:[%s978 + $0x4] sm:$0xf]
    %v981 = vld [vmem:[%s978 + $0x8] sm:$0xf]
    %v982 = vld [vmem:[%s978 + $0xc] sm:$0xf]
    %v983 = vld [vmem:[%s978 + $0x10] sm:$0xf]
    %v984 = vld [vmem:[%s978 + $0x14] sm:$0xf]
    %v985 = vld [vmem:[%s978 + $0x18] sm:$0xf]
    %v986 = vld [vmem:[%s978 + $0x1c] sm:$0xf]
    %v987 = vld [vmem:[%s978 + $0x20] sm:$0xf]
    %v988 = vld [vmem:[%s978 + $0x24] sm:$0xf]
    %v989 = vld [vmem:[%s978 + $0x28] sm:$0xf]
    %v990 = vld [vmem:[%s978 + $0x2c] sm:$0xf]
    %v991 = vld [vmem:[%s978 + $0x30] sm:$0xf]
    %v992 = vld [vmem:[%s978 + $0x34] sm:$0xf]
    %v993 = vld [vmem:[%s978 + $0x38] sm:$0xf]
    %v994 = vld [vmem:[%s978 + $0x3c] sm:$0xf]
    %v995 = vld [vmem:[%s978 + $0x40] sm:$0xf]
    %v996 = vld [vmem:[%s978 + $0x44] sm:$0xf]
    %v998 = vshrl.u32 %v974, 16
    %v1000 = vshll.u32 %v974, 16
    %v1002 = vrot.slane %v1000, 1
    %v1003 = vor.u32 %v998, %v1002
    %v1005 = vshll.u32 %v976, 16
    %v1007 = vrot.slane %v1005, 1
    %v1008 = vsel %vm190, %v1003, %v1007
    %v1010 = vshrl.u32 %v975, 16
    %v1012 = vshll.u32 %v975, 16
    %v1014 = vrot.slane %v1012, 1
    %v1015 = vor.u32 %v1010, %v1014
    %v1017 = vshll.u32 %v977, 16
    %v1019 = vrot.slane %v1017, 1
    %v1020 = vsel %vm190, %v1015, %v1019
    %v1040 = vunpack.c.l.b16 %v979
    %v1041 = vunpack.c.l.b16 %v980
    %v1042 = vunpack.c.l.b16 %v981
    %v1043 = vunpack.c.l.b16 %v982
    %v1044 = vunpack.c.l.b16 %v983
    %v1045 = vunpack.c.l.b16 %v984
    %v1046 = vunpack.c.l.b16 %v985
    %v1047 = vunpack.c.l.b16 %v986
    %v1048 = vunpack.c.l.b16 %v987
    %v1049 = vunpack.c.l.b16 %v988
    %v1050 = vunpack.c.l.b16 %v989
    %v1051 = vunpack.c.l.b16 %v990
    %v1052 = vunpack.c.l.b16 %v991
    %v1053 = vunpack.c.l.b16 %v992
    %v1054 = vunpack.c.l.b16 %v993
    %v1055 = vunpack.c.l.b16 %v994
    %v1056 = vunpack.c.l.b16 %v995
    %v1057 = vunpack.c.l.b16 %v996
    %v1058 = vpack.c.b16 %v1041, %v1040
    %v1059 = vpack.c.b16 %v1043, %v1042
    %v1060 = vpack.c.b16 %v1045, %v1044
    %v1061 = vpack.c.b16 %v1047, %v1046
    %v1062 = vpack.c.b16 %v1049, %v1048
    %v1063 = vpack.c.b16 %v1051, %v1050
    %v1064 = vpack.c.b16 %v1053, %v1052
    %v1065 = vpack.c.b16 %v1055, %v1054
    %v1066 = vpack.c.b16 %v1057, %v1056
    %v1077 = vsel %vm270, %v1020, 0
    %1079 = vmatprep.subr.bf16.mxu0 0
    %1080 = vmatpush1.bf16.msra.mxu0 %v1058
    %1081 = vmatprep.subr.bf16.mxu0 0
    %1082 = vmatpush1.bf16.msra.mxu0 %v1059
    %1083 = vmatprep.subr.bf16.mxu0 0
    %1084 = vmatpush1.bf16.msra.mxu0 %v1060
    %1085 = vmatprep.subr.bf16.mxu0 0
    %1086 = vmatpush1.bf16.msra.mxu0 %v1061
    %1087 = vmatprep.subr.bf16.mxu0 0
    %1088 = vmatpush1.bf16.msra.mxu0 %v1062
    %1089 = vmatprep.subr.bf16.mxu0 0
    %1090 = vmatpush1.bf16.msra.mxu0 %v1063
    %1091 = vmatprep.subr.bf16.mxu0 0
    %1092 = vmatpush1.bf16.msra.mxu0 %v1064
    %1093 = vmatprep.subr.bf16.mxu0 0
    %1094 = vmatpush1.bf16.msra.mxu0 %v1065
    %1095 = vmatprep.subr.bf16.mxu0 0
    %1096 = vmatpush1.bf16.msra.mxu0 %v1066
    %1097 = vmatprep.subr.bf16.mxu0 0
    %1098 = vmatpush1.bf16.msra.mxu0 0
    %1099 = vmatprep.subr.bf16.mxu0 0
    %1100 = vmatpush1.bf16.msra.mxu0 0
    %1101 = vmatprep.subr.bf16.mxu0 0
    %1102 = vmatpush1.bf16.msra.mxu0 0
    %1103 = vmatprep.subr.bf16.mxu0 0
    %1104 = vmatpush1.bf16.msra.mxu0 0
    %1105 = vmatprep.subr.bf16.mxu0 0
    %1106 = vmatpush1.bf16.msra.mxu0 0
    %1107 = vmatprep.subr.bf16.mxu0 0
    %1108 = vmatpush1.bf16.msra.mxu0 0
    %1109 = vmatprep.subr.bf16.mxu0 0
    %1110 = vmatpush1.bf16.msra.mxu0 0
    %1111 = vmatprep.mubr.bf16.mxu0 %v1077
    %1112 = vmatmul.mubr.bf16.gmra.mrb[0].mxu0 %v1008
    %v1113 = vpop.f32.mrb[0].mxu0
    %v1114 = vadd.f32 0.0, %v1113
    %v1115 = vpop.f32.mrb[0].mxu0
    %v1116 = vpop.f32.mrb[0].mxu0
    %v1117 = vadd.f32 0.0, %v1116
    %v1118 = vpop.f32.mrb[0].mxu0
    %1119 = vdwg.mxu0
    %v1138 = vunpack.c.l.b16 %v952
    %v1139 = vunpack.c.l.b16 %v953
    %v1140 = vunpack.c.l.b16 %v954
    %v1141 = vunpack.c.l.b16 %v955
    %v1142 = vunpack.c.l.b16 %v956
    %v1143 = vunpack.c.l.b16 %v957
    %v1144 = vunpack.c.l.b16 %v958
    %v1145 = vunpack.c.l.b16 %v959
    %v1146 = vunpack.c.l.b16 %v960
    %v1147 = vunpack.c.l.b16 %v961
    %v1148 = vunpack.c.l.b16 %v962
    %v1149 = vunpack.c.l.b16 %v963
    %v1150 = vunpack.c.l.b16 %v964
    %v1151 = vunpack.c.l.b16 %v965
    %v1152 = vunpack.c.l.b16 %v966
    %v1153 = vunpack.c.l.b16 %v967
    %v1154 = vunpack.c.l.b16 %v968
    %v1155 = vunpack.c.l.b16 %v969
    %v1156 = vpack.c.b16 %v1139, %v1138
    %v1157 = vpack.c.b16 %v1141, %v1140
    %v1158 = vpack.c.b16 %v1143, %v1142
    %v1159 = vpack.c.b16 %v1145, %v1144
    %v1160 = vpack.c.b16 %v1147, %v1146
    %v1161 = vpack.c.b16 %v1149, %v1148
    %v1162 = vpack.c.b16 %v1151, %v1150
    %v1163 = vpack.c.b16 %v1153, %v1152
    %v1164 = vpack.c.b16 %v1155, %v1154
    %v1175 = vsel %vm270, %v951, 0
    %1177 = vmatprep.subr.bf16.mxu0 0
    %1178 = vmatpush1.bf16.msra.mxu0 %v1156
    %1179 = vmatprep.subr.bf16.mxu0 0
    %1180 = vmatpush1.bf16.msra.mxu0 %v1157
    %1181 = vmatprep.subr.bf16.mxu0 0
    %1182 = vmatpush1.bf16.msra.mxu0 %v1158
    %1183 = vmatprep.subr.bf16.mxu0 0
    %1184 = vmatpush1.bf16.msra.mxu0 %v1159
    %1185 = vmatprep.subr.bf16.mxu0 0
    %1186 = vmatpush1.bf16.msra.mxu0 %v1160
    %1187 = vmatprep.subr.bf16.mxu0 0
    %1188 = vmatpush1.bf16.msra.mxu0 %v1161
    %1189 = vmatprep.subr.bf16.mxu0 0
    %1190 = vmatpush1.bf16.msra.mxu0 %v1162
    %1191 = vmatprep.subr.bf16.mxu0 0
    %1192 = vmatpush1.bf16.msra.mxu0 %v1163
    %1193 = vmatprep.subr.bf16.mxu0 0
    %1194 = vmatpush1.bf16.msra.mxu0 %v1164
    %1195 = vmatprep.subr.bf16.mxu0 0
    %1196 = vmatpush1.bf16.msra.mxu0 0
    %1197 = vmatprep.subr.bf16.mxu0 0
    %1198 = vmatpush1.bf16.msra.mxu0 0
    %1199 = vmatprep.subr.bf16.mxu0 0
    %1200 = vmatpush1.bf16.msra.mxu0 0
    %1201 = vmatprep.subr.bf16.mxu0 0
    %1202 = vmatpush1.bf16.msra.mxu0 0
    %1203 = vmatprep.subr.bf16.mxu0 0
    %1204 = vmatpush1.bf16.msra.mxu0 0
    %1205 = vmatprep.subr.bf16.mxu0 0
    %1206 = vmatpush1.bf16.msra.mxu0 0
    %1207 = vmatprep.subr.bf16.mxu0 0
    %1208 = vmatpush1.bf16.msra.mxu0 0
    %1209 = vmatprep.mubr.bf16.mxu0 %v1175
    %1210 = vmatmul.mubr.bf16.gmra.mrb[0].mxu0 %v950
    %v1211 = vpop.f32.mrb[0].mxu0
    %v1212 = vadd.f32 %v1114, %v1211
    %v1213 = vpop.f32.mrb[0].mxu0
    %v1214 = vpop.f32.mrb[0].mxu0
    %v1215 = vadd.f32 %v1117, %v1214
    %v1216 = vpop.f32.mrb[0].mxu0
    %1217 = vdwg.mxu0
    %v1218 = vld [vmem:[#allocation2] sm:$0xfc]
    %v1219 = vld [vmem:[#allocation2 + $0x8] sm:$0xfc]
    %v1220 = vld [vmem:[#allocation2 + $0x20] sm:$0x3]
    %v1221 = vld [vmem:[#allocation2 + $0x28] sm:$0x3]
    %v1222 = vpack.c.bf16 %v948, %v1218
    %v1223 = vpack.c.bf16 %v949, %v1219
    %v1224 = vpack.c.bf16 %v1220, %v1220
    %v1225 = vpack.c.bf16 %v1221, %v1221
    %s1226 = scalar_lea.vmem [#allocation6], 144
    %v1227 = vld [vmem:[%s1226] sm:$0xf]
    %v1228 = vld [vmem:[%s1226 + $0x4] sm:$0xf]
    %v1229 = vld [vmem:[%s1226 + $0x8] sm:$0xf]
    %v1230 = vld [vmem:[%s1226 + $0xc] sm:$0xf]
    %v1231 = vld [vmem:[%s1226 + $0x10] sm:$0xf]
    %v1232 = vld [vmem:[%s1226 + $0x14] sm:$0xf]
    %v1233 = vld [vmem:[%s1226 + $0x18] sm:$0xf]
    %v1234 = vld [vmem:[%s1226 + $0x1c] sm:$0xf]
    %v1235 = vld [vmem:[%s1226 + $0x20] sm:$0xf]
    %v1236 = vld [vmem:[%s1226 + $0x24] sm:$0xf]
    %v1237 = vld [vmem:[%s1226 + $0x28] sm:$0xf]
    %v1238 = vld [vmem:[%s1226 + $0x2c] sm:$0xf]
    %v1239 = vld [vmem:[%s1226 + $0x30] sm:$0xf]
    %v1240 = vld [vmem:[%s1226 + $0x34] sm:$0xf]
    %v1241 = vld [vmem:[%s1226 + $0x38] sm:$0xf]
    %v1242 = vld [vmem:[%s1226 + $0x3c] sm:$0xf]
    %v1243 = vld [vmem:[%s1226 + $0x40] sm:$0xf]
    %v1244 = vld [vmem:[%s1226 + $0x44] sm:$0xf]
    %v1249 = vrot.slane %v1222, 1
    %v1250 = vrot.slane %v1224, 1
    %v1251 = vsel %vm444, %v1249, %v1250
    %v1252 = vrot.slane %v1223, 1
    %v1253 = vrot.slane %v1225, 1
    %v1254 = vsel %vm444, %v1252, %v1253
    %v1274 = vunpack.c.l.b16 %v1227
    %v1275 = vunpack.c.l.b16 %v1228
    %v1276 = vunpack.c.l.b16 %v1229
    %v1277 = vunpack.c.l.b16 %v1230
    %v1278 = vunpack.c.l.b16 %v1231
    %v1279 = vunpack.c.l.b16 %v1232
    %v1280 = vunpack.c.l.b16 %v1233
    %v1281 = vunpack.c.l.b16 %v1234
    %v1282 = vunpack.c.l.b16 %v1235
    %v1283 = vunpack.c.l.b16 %v1236
    %v1284 = vunpack.c.l.b16 %v1237
    %v1285 = vunpack.c.l.b16 %v1238
    %v1286 = vunpack.c.l.b16 %v1239
    %v1287 = vunpack.c.l.b16 %v1240
    %v1288 = vunpack.c.l.b16 %v1241
    %v1289 = vunpack.c.l.b16 %v1242
    %v1290 = vunpack.c.l.b16 %v1243
    %v1291 = vunpack.c.l.b16 %v1244
    %v1292 = vpack.c.b16 %v1275, %v1274
    %v1293 = vpack.c.b16 %v1277, %v1276
    %v1294 = vpack.c.b16 %v1279, %v1278
    %v1295 = vpack.c.b16 %v1281, %v1280
    %v1296 = vpack.c.b16 %v1283, %v1282
    %v1297 = vpack.c.b16 %v1285, %v1284
    %v1298 = vpack.c.b16 %v1287, %v1286
    %v1299 = vpack.c.b16 %v1289, %v1288
    %v1300 = vpack.c.b16 %v1291, %v1290
    %v1311 = vsel %vm270, %v1254, 0
    %1313 = vmatprep.subr.bf16.mxu0 0
    %1314 = vmatpush1.bf16.msra.mxu0 %v1292
    %1315 = vmatprep.subr.bf16.mxu0 0
    %1316 = vmatpush1.bf16.msra.mxu0 %v1293
    %1317 = vmatprep.subr.bf16.mxu0 0
    %1318 = vmatpush1.bf16.msra.mxu0 %v1294
    %1319 = vmatprep.subr.bf16.mxu0 0
    %1320 = vmatpush1.bf16.msra.mxu0 %v1295
    %1321 = vmatprep.subr.bf16.mxu0 0
    %1322 = vmatpush1.bf16.msra.mxu0 %v1296
    %1323 = vmatprep.subr.bf16.mxu0 0
    %1324 = vmatpush1.bf16.msra.mxu0 %v1297
    %1325 = vmatprep.subr.bf16.mxu0 0
    %1326 = vmatpush1.bf16.msra.mxu0 %v1298
    %1327 = vmatprep.subr.bf16.mxu0 0
    %1328 = vmatpush1.bf16.msra.mxu0 %v1299
    %1329 = vmatprep.subr.bf16.mxu0 0
    %1330 = vmatpush1.bf16.msra.mxu0 %v1300
    %1331 = vmatprep.subr.bf16.mxu0 0
    %1332 = vmatpush1.bf16.msra.mxu0 0
    %1333 = vmatprep.subr.bf16.mxu0 0
    %1334 = vmatpush1.bf16.msra.mxu0 0
    %1335 = vmatprep.subr.bf16.mxu0 0
    %1336 = vmatpush1.bf16.msra.mxu0 0
    %1337 = vmatprep.subr.bf16.mxu0 0
    %1338 = vmatpush1.bf16.msra.mxu0 0
    %1339 = vmatprep.subr.bf16.mxu0 0
    %1340 = vmatpush1.bf16.msra.mxu0 0
    %1341 = vmatprep.subr.bf16.mxu0 0
    %1342 = vmatpush1.bf16.msra.mxu0 0
    %1343 = vmatprep.subr.bf16.mxu0 0
    %1344 = vmatpush1.bf16.msra.mxu0 0
    %1345 = vmatprep.mubr.bf16.mxu0 %v1311
    %1346 = vmatmul.mubr.bf16.gmra.mrb[0].mxu0 %v1251
    %v1347 = vpop.f32.mrb[0].mxu0
    %v1348 = vadd.f32 0.0, %v1347
    %v1349 = vpop.f32.mrb[0].mxu0
    %v1350 = vpop.f32.mrb[0].mxu0
    %v1351 = vadd.f32 0.0, %v1350
    %v1352 = vpop.f32.mrb[0].mxu0
    %1353 = vdwg.mxu0
    %v1354 = vadd.f32 %v1212, %v1348
    %v1355 = vadd.f32 %v1215, %v1351
    %v1356 = vld [vmem:[%s7] sm:$0xff]
    %v1357 = vld [vmem:[%s7 + $0x8] sm:$0xff]
    %v1358 = vld [vmem:[%s7 + $0x10] sm:$0xff]
    %v1359 = vld [vmem:[%s7 + $0x18] sm:$0xff]
    %v1360 = vld [vmem:[%s7 + $0x20] sm:$0xff]
    %v1361 = vld [vmem:[%s7 + $0x28] sm:$0xff]
    %v1362 = vld [vmem:[%s7 + $0x30] sm:$0xff]
    %v1363 = vld [vmem:[%s7 + $0x38] sm:$0xff]
    %v1364 = vld [vmem:[%s7 + $0x40] sm:$0xff]
    %v1365 = vld [vmem:[%s7 + $0x48] sm:$0xff]
    %v1366 = vld [vmem:[%s7 + $0x50] sm:$0xff]
    %v1367 = vld [vmem:[%s7 + $0x58] sm:$0xff]
    %v1368 = vld [vmem:[%s7 + $0x60] sm:$0xff]
    %v1369 = vld [vmem:[%s7 + $0x68] sm:$0xff]
    %v1370 = vld [vmem:[%s7 + $0x70] sm:$0xff]
    %v1371 = vld [vmem:[%s7 + $0x78] sm:$0xff]
    %1372 = vmatprep.subr.mxu0 0.0
    %1373 = vmatpush1.msra.mxu0 %v1356
    %1374 = vmatprep.subr.mxu0 0.0
    %1375 = vmatpush1.msra.mxu0 %v1357
    %1376 = vmatprep.subr.mxu0 0.0
    %1377 = vmatpush1.msra.mxu0 %v1358
    %1378 = vmatprep.subr.mxu0 0.0
    %1379 = vmatpush1.msra.mxu0 %v1359
    %1380 = vmatprep.subr.mxu0 0.0
    %1381 = vmatpush1.msra.mxu0 %v1360
    %1382 = vmatprep.subr.mxu0 0.0
    %1383 = vmatpush1.msra.mxu0 %v1361
    %1384 = vmatprep.subr.mxu0 0.0
    %1385 = vmatpush1.msra.mxu0 %v1362
    %1386 = vmatprep.subr.mxu0 0.0
    %1387 = vmatpush1.msra.mxu0 %v1363
    %1388 = vmatprep.subr.mxu0 0.0
    %1389 = vmatpush1.msra.mxu0 %v1364
    %1390 = vmatprep.subr.mxu0 0.0
    %1391 = vmatpush1.msra.mxu0 %v1365
    %1392 = vmatprep.subr.mxu0 0.0
    %1393 = vmatpush1.msra.mxu0 %v1366
    %1394 = vmatprep.subr.mxu0 0.0
    %1395 = vmatpush1.msra.mxu0 %v1367
    %1396 = vmatprep.subr.mxu0 0.0
    %1397 = vmatpush1.msra.mxu0 %v1368
    %1398 = vmatprep.subr.mxu0 0.0
    %1399 = vmatpush1.msra.mxu0 %v1369
    %1400 = vmatprep.subr.mxu0 0.0
    %1401 = vmatpush1.msra.mxu0 %v1370
    %1402 = vmatprep.subr.mxu0 0.0
    %1403 = vmatpush1.msra.mxu0 %v1371
    %1404 = vmatprep.subr.mxu0 0.0
    %1405 = vmatpush1.msra.mxu0 0.0
    %1406 = vmatprep.subr.mxu0 0.0
    %1407 = vmatpush1.msra.mxu0 0.0
    %1408 = vmatprep.subr.mxu0 0.0
    %1409 = vmatpush1.msra.mxu0 0.0
    %1410 = vmatprep.subr.mxu0 0.0
    %1411 = vmatpush1.msra.mxu0 0.0
    %1412 = vmatprep.subr.mxu0 0.0
    %1413 = vmatpush1.msra.mxu0 0.0
    %1414 = vmatprep.subr.mxu0 0.0
    %1415 = vmatpush1.msra.mxu0 0.0
    %1416 = vmatprep.subr.mxu0 0.0
    %1417 = vmatpush1.msra.mxu0 0.0
    %1418 = vmatprep.subr.mxu0 0.0
    %1419 = vmatpush1.msra.mxu0 0.0
    %1420 = vmatprep.subr.mxu0 0.0
    %1421 = vmatpush1.msra.mxu0 0.0
    %1422 = vmatprep.subr.mxu0 0.0
    %1423 = vmatpush1.msra.mxu0 0.0
    %1424 = vmatprep.subr.mxu0 0.0
    %1425 = vmatpush1.msra.mxu0 0.0
    %1426 = vmatprep.subr.mxu0 0.0
    %1427 = vmatpush1.msra.mxu0 0.0
    %1428 = vmatprep.subr.mxu0 0.0
    %1429 = vmatpush1.msra.mxu0 0.0
    %1430 = vmatprep.subr.mxu0 0.0
    %1431 = vmatpush1.msra.mxu0 0.0
    %1432 = vmatprep.subr.mxu0 0.0
    %1433 = vmatpush1.msra.mxu0 0.0
    %1434 = vmatprep.subr.mxu0 0.0
    %1435 = vmatpush1.msra.mxu0 0.0
    %1436 = vmatprep.mubr.f32.mxu0 0.0
    %1437 = vmatmul.mubr.f32.gmra.mrb[0].mxu0 %v1354
    %v1438 = vpop.f32.mrb[0].mxu0
    %v1439 = vadd.f32 0.0, %v1438
    %v1440 = vpop.f32.mrb[0].mxu0
    %1441 = vmatprep.mubr.f32.mxu0 0.0
    %1442 = vmatmul.mubr.f32.gmra.mrb[0].mxu0 %v1355
    %v1443 = vpop.f32.mrb[0].mxu0
    %v1444 = vadd.f32 0.0, %v1443
    %v1445 = vpop.f32.mrb[0].mxu0
    %1446 = vdwg.mxu0
    %v1447 = vsel %vm75, %v1439, 0.0
    %v1448 = vsel %vm75, %v1444, 0.0
    %v1449 = vadd.f32 %v1447, %v1448
    %v1450 = vrot.slane %v1449, 4
    %v1451 = vadd.f32 %v1449, %v1450
    %v1452 = vrot.slane %v1451, 2
    %v1453 = vadd.f32 %v1451, %v1452
    %v1454 = vrot.slane %v1453, 1
    %v1455 = vadd.f32 %v1453, %v1454
    %v1456 = vmul.f32 %v1354, %v1354
    %v1457 = vmul.f32 %v1355, %v1355
    %1458 = vmatprep.subr.mxu0 0.0
    %1459 = vmatpush1.msra.mxu0 %v1356
    %1460 = vmatprep.subr.mxu0 0.0
    %1461 = vmatpush1.msra.mxu0 %v1357
    %1462 = vmatprep.subr.mxu0 0.0
    %1463 = vmatpush1.msra.mxu0 %v1358
    %1464 = vmatprep.subr.mxu0 0.0
    %1465 = vmatpush1.msra.mxu0 %v1359
    %1466 = vmatprep.subr.mxu0 0.0
    %1467 = vmatpush1.msra.mxu0 %v1360
    %1468 = vmatprep.subr.mxu0 0.0
    %1469 = vmatpush1.msra.mxu0 %v1361
    %1470 = vmatprep.subr.mxu0 0.0
    %1471 = vmatpush1.msra.mxu0 %v1362
    %1472 = vmatprep.subr.mxu0 0.0
    %1473 = vmatpush1.msra.mxu0 %v1363
    %1474 = vmatprep.subr.mxu0 0.0
    %1475 = vmatpush1.msra.mxu0 %v1364
    %1476 = vmatprep.subr.mxu0 0.0
    %1477 = vmatpush1.msra.mxu0 %v1365
    %1478 = vmatprep.subr.mxu0 0.0
    %1479 = vmatpush1.msra.mxu0 %v1366
    %1480 = vmatprep.subr.mxu0 0.0
    %1481 = vmatpush1.msra.mxu0 %v1367
    %1482 = vmatprep.subr.mxu0 0.0
    %1483 = vmatpush1.msra.mxu0 %v1368
    %1484 = vmatprep.subr.mxu0 0.0
    %1485 = vmatpush1.msra.mxu0 %v1369
    %1486 = vmatprep.subr.mxu0 0.0
    %1487 = vmatpush1.msra.mxu0 %v1370
    %1488 = vmatprep.subr.mxu0 0.0
    %1489 = vmatpush1.msra.mxu0 %v1371
    %1490 = vmatprep.subr.mxu0 0.0
    %1491 = vmatpush1.msra.mxu0 0.0
    %1492 = vmatprep.subr.mxu0 0.0
    %1493 = vmatpush1.msra.mxu0 0.0
    %1494 = vmatprep.subr.mxu0 0.0
    %1495 = vmatpush1.msra.mxu0 0.0
    %1496 = vmatprep.subr.mxu0 0.0
    %1497 = vmatpush1.msra.mxu0 0.0
    %1498 = vmatprep.subr.mxu0 0.0
    %1499 = vmatpush1.msra.mxu0 0.0
    %1500 = vmatprep.subr.mxu0 0.0
    %1501 = vmatpush1.msra.mxu0 0.0
    %1502 = vmatprep.subr.mxu0 0.0
    %1503 = vmatpush1.msra.mxu0 0.0
    %1504 = vmatprep.subr.mxu0 0.0
    %1505 = vmatpush1.msra.mxu0 0.0
    %1506 = vmatprep.subr.mxu0 0.0
    %1507 = vmatpush1.msra.mxu0 0.0
    %1508 = vmatprep.subr.mxu0 0.0
    %1509 = vmatpush1.msra.mxu0 0.0
    %1510 = vmatprep.subr.mxu0 0.0
    %1511 = vmatpush1.msra.mxu0 0.0
    %1512 = vmatprep.subr.mxu0 0.0
    %1513 = vmatpush1.msra.mxu0 0.0
    %1514 = vmatprep.subr.mxu0 0.0
    %1515 = vmatpush1.msra.mxu0 0.0
    %1516 = vmatprep.subr.mxu0 0.0
    %1517 = vmatpush1.msra.mxu0 0.0
    %1518 = vmatprep.subr.mxu0 0.0
    %1519 = vmatpush1.msra.mxu0 0.0
    %1520 = vmatprep.subr.mxu0 0.0
    %1521 = vmatpush1.msra.mxu0 0.0
    %1522 = vmatprep.mubr.f32.mxu0 0.0
    %1523 = vmatmul.mubr.f32.gmra.mrb[0].mxu0 %v1456
    %v1524 = vpop.f32.mrb[0].mxu0
    %v1525 = vadd.f32 0.0, %v1524
    %v1526 = vpop.f32.mrb[0].mxu0
    %1527 = vmatprep.mubr.f32.mxu0 0.0
    %1528 = vmatmul.mubr.f32.gmra.mrb[0].mxu0 %v1457
    %v1529 = vpop.f32.mrb[0].mxu0
    %v1530 = vadd.f32 0.0, %v1529
    %v1531 = vpop.f32.mrb[0].mxu0
    %1532 = vdwg.mxu0
    %v1533 = vsel %vm75, %v1525, 0.0
    %v1534 = vsel %vm75, %v1530, 0.0
    %v1535 = vadd.f32 %v1533, %v1534
    %v1536 = vrot.slane %v1535, 4
    %v1537 = vadd.f32 %v1535, %v1536
    %v1538 = vrot.slane %v1537, 2
    %v1539 = vadd.f32 %v1537, %v1538
    %v1540 = vrot.slane %v1539, 1
    %v1541 = vadd.f32 %v1539, %v1540
    %v1542 = vmul.f32 %v1455, 0.001953125
    %v1543 = vmul.f32 %v1541, 0.001953125
    %v1544 = vmul.f32 %v1542, %v1542
    %v1545 = vsub.f32 %v1543, %v1544
    %v1546 = vld [vmem:[%s5] sm:$0x1]
    %v1547 = vadd.f32 %v1545, 1e-05
    %v1548 = vrsqrt.pop %v1547
    %v1549 = vmul.f32 %v1546, %v1548
    %v1550 = vld [vmem:[%s6] sm:$0x1]
    %v1551 = vmul.f32 %v1542, %v1549
    %v1552 = vsub.f32 %v1550, %v1551
    %v1553 = vld [vmem:[%s8] sm:$0xf]
    %v1555 = vsel %vm75, %v1549, 0
    %v1558 = vsel %vm753, %v1553, 0
    %1560 = vmatprep.subr.mxu0 0.0
    %1561 = vmatpush1.msra.mxu0 %v1558
    %1562 = vmatprep.subr.mxu0 0.0
    %1563 = vmatpush1.msra.mxu0 0.0
    %1564 = vmatprep.subr.mxu0 0.0
    %1565 = vmatpush1.msra.mxu0 0.0
    %1566 = vmatprep.subr.mxu0 0.0
    %1567 = vmatpush1.msra.mxu0 0.0
    %1568 = vmatprep.subr.mxu0 0.0
    %1569 = vmatpush1.msra.mxu0 0.0
    %1570 = vmatprep.subr.mxu0 0.0
    %1571 = vmatpush1.msra.mxu0 0.0
    %1572 = vmatprep.subr.mxu0 0.0
    %1573 = vmatpush1.msra.mxu0 0.0
    %1574 = vmatprep.subr.mxu0 0.0
    %1575 = vmatpush1.msra.mxu0 0.0
    %1576 = vmatprep.subr.mxu0 0.0
    %1577 = vmatpush1.msra.mxu0 0.0
    %1578 = vmatprep.subr.mxu0 0.0
    %1579 = vmatpush1.msra.mxu0 0.0
    %1580 = vmatprep.subr.mxu0 0.0
    %1581 = vmatpush1.msra.mxu0 0.0
    %1582 = vmatprep.subr.mxu0 0.0
    %1583 = vmatpush1.msra.mxu0 0.0
    %1584 = vmatprep.subr.mxu0 0.0
    %1585 = vmatpush1.msra.mxu0 0.0
    %1586 = vmatprep.subr.mxu0 0.0
    %1587 = vmatpush1.msra.mxu0 0.0
    %1588 = vmatprep.subr.mxu0 0.0
    %1589 = vmatpush1.msra.mxu0 0.0
    %1590 = vmatprep.subr.mxu0 0.0
    %1591 = vmatpush1.msra.mxu0 0.0
    %1592 = vmatprep.subr.mxu0 0.0
    %1593 = vmatpush1.msra.mxu0 0.0
    %1594 = vmatprep.subr.mxu0 0.0
    %1595 = vmatpush1.msra.mxu0 0.0
    %1596 = vmatprep.subr.mxu0 0.0
    %1597 = vmatpush1.msra.mxu0 0.0
    %1598 = vmatprep.subr.mxu0 0.0
    %1599 = vmatpush1.msra.mxu0 0.0
    %1600 = vmatprep.subr.mxu0 0.0
    %1601 = vmatpush1.msra.mxu0 0.0
    %1602 = vmatprep.subr.mxu0 0.0
    %1603 = vmatpush1.msra.mxu0 0.0
    %1604 = vmatprep.subr.mxu0 0.0
    %1605 = vmatpush1.msra.mxu0 0.0
    %1606 = vmatprep.subr.mxu0 0.0
    %1607 = vmatpush1.msra.mxu0 0.0
    %1608 = vmatprep.subr.mxu0 0.0
    %1609 = vmatpush1.msra.mxu0 0.0
    %1610 = vmatprep.subr.mxu0 0.0
    %1611 = vmatpush1.msra.mxu0 0.0
    %1612 = vmatprep.subr.mxu0 0.0
    %1613 = vmatpush1.msra.mxu0 0.0
    %1614 = vmatprep.subr.mxu0 0.0
    %1615 = vmatpush1.msra.mxu0 0.0
    %1616 = vmatprep.subr.mxu0 0.0
    %1617 = vmatpush1.msra.mxu0 0.0
    %1618 = vmatprep.subr.mxu0 0.0
    %1619 = vmatpush1.msra.mxu0 0.0
    %1620 = vmatprep.subr.mxu0 0.0
    %1621 = vmatpush1.msra.mxu0 0.0
    %1622 = vmatprep.subr.mxu0 0.0
    %1623 = vmatpush1.msra.mxu0 0.0
    %1624 = vmatprep.mubr.f32.mxu0 0.0
    %1625 = vmatmul.mubr.f32.gmra.mrb[0].mxu0 %v1555
    %v1626 = vpop.f32.mrb[0].mxu0
    %v1627 = vadd.f32 0.0, %v1626
    %v1628 = vpop.f32.mrb[0].mxu0
    %1629 = vdwg.mxu0
    %v1631 = vsel %vm75, %v1552, 0
    %1633 = vmatprep.subr.mxu0 0.0
    %1634 = vmatpush1.msra.mxu0 %v1558
    %1635 = vmatprep.subr.mxu0 0.0
    %1636 = vmatpush1.msra.mxu0 0.0
    %1637 = vmatprep.subr.mxu0 0.0
    %1638 = vmatpush1.msra.mxu0 0.0
    %1639 = vmatprep.subr.mxu0 0.0
    %1640 = vmatpush1.msra.mxu0 0.0
    %1641 = vmatprep.subr.mxu0 0.0
    %1642 = vmatpush1.msra.mxu0 0.0
    %1643 = vmatprep.subr.mxu0 0.0
    %1644 = vmatpush1.msra.mxu0 0.0
    %1645 = vmatprep.subr.mxu0 0.0
    %1646 = vmatpush1.msra.mxu0 0.0
    %1647 = vmatprep.subr.mxu0 0.0
    %1648 = vmatpush1.msra.mxu0 0.0
    %1649 = vmatprep.subr.mxu0 0.0
    %1650 = vmatpush1.msra.mxu0 0.0
    %1651 = vmatprep.subr.mxu0 0.0
    %1652 = vmatpush1.msra.mxu0 0.0
    %1653 = vmatprep.subr.mxu0 0.0
    %1654 = vmatpush1.msra.mxu0 0.0
    %1655 = vmatprep.subr.mxu0 0.0
    %1656 = vmatpush1.msra.mxu0 0.0
    %1657 = vmatprep.subr.mxu0 0.0
    %1658 = vmatpush1.msra.mxu0 0.0
    %1659 = vmatprep.subr.mxu0 0.0
    %1660 = vmatpush1.msra.mxu0 0.0
    %1661 = vmatprep.subr.mxu0 0.0
    %1662 = vmatpush1.msra.mxu0 0.0
    %1663 = vmatprep.subr.mxu0 0.0
    %1664 = vmatpush1.msra.mxu0 0.0
    %1665 = vmatprep.subr.mxu0 0.0
    %1666 = vmatpush1.msra.mxu0 0.0
    %1667 = vmatprep.subr.mxu0 0.0
    %1668 = vmatpush1.msra.mxu0 0.0
    %1669 = vmatprep.subr.mxu0 0.0
    %1670 = vmatpush1.msra.mxu0 0.0
    %1671 = vmatprep.subr.mxu0 0.0
    %1672 = vmatpush1.msra.mxu0 0.0
    %1673 = vmatprep.subr.mxu0 0.0
    %1674 = vmatpush1.msra.mxu0 0.0
    %1675 = vmatprep.subr.mxu0 0.0
    %1676 = vmatpush1.msra.mxu0 0.0
    %1677 = vmatprep.subr.mxu0 0.0
    %1678 = vmatpush1.msra.mxu0 0.0
    %1679 = vmatprep.subr.mxu0 0.0
    %1680 = vmatpush1.msra.mxu0 0.0
    %1681 = vmatprep.subr.mxu0 0.0
    %1682 = vmatpush1.msra.mxu0 0.0
    %1683 = vmatprep.subr.mxu0 0.0
    %1684 = vmatpush1.msra.mxu0 0.0
    %1685 = vmatprep.subr.mxu0 0.0
    %1686 = vmatpush1.msra.mxu0 0.0
    %1687 = vmatprep.subr.mxu0 0.0
    %1688 = vmatpush1.msra.mxu0 0.0
    %1689 = vmatprep.subr.mxu0 0.0
    %1690 = vmatpush1.msra.mxu0 0.0
    %1691 = vmatprep.subr.mxu0 0.0
    %1692 = vmatpush1.msra.mxu0 0.0
    %1693 = vmatprep.subr.mxu0 0.0
    %1694 = vmatpush1.msra.mxu0 0.0
    %1695 = vmatprep.subr.mxu0 0.0
    %1696 = vmatpush1.msra.mxu0 0.0
    %1697 = vmatprep.mubr.f32.mxu0 0.0
    %1698 = vmatmul.mubr.f32.gmra.mrb[0].mxu0 %v1631
    %v1699 = vpop.f32.mrb[0].mxu0
    %v1700 = vadd.f32 0.0, %v1699
    %v1701 = vpop.f32.mrb[0].mxu0
    %1702 = vdwg.mxu0
    %v1703 = vlaneseq
    %v1704 = vshrl.u32 %v1703, 7
    %v1705 = vsub.s32 0, %v1704
    %v1706 = vrot.slane %v1627, %v1705
    %v1707 = vmul.f32 %v1354, %v1706
    %v1708 = vmul.f32 %v1355, %v1706
    %v1709 = vlaneseq
    %v1710 = vshrl.u32 %v1709, 7
    %v1711 = vsub.s32 0, %v1710
    %v1712 = vrot.slane %v1700, %v1711
    %v1713 = vadd.f32 %v1707, %v1712
    %v1714 = vadd.f32 %v1708, %v1712
    %v1715 = vadd.f32 %v1713, %v62
    %v1716 = vadd.f32 %v1714, %v63
    %v1717 = vmax.f32 %v1715, 0.0
    %v1718 = vmax.f32 %v1716, 0.0
    %1719 = vst [vmem:[#allocation8] sm:$0xff] %v1717
    %1720 = vst [vmem:[#allocation8 + $0x8] sm:$0xff] %v1718
    // Predicated region
    $region46: #{tpu_custom_call.1} parent=1 // pred_check
      _
    $region47: #{tpu_custom_call.1} parent=1 // pred_check_branch
      %1722 = sbr.rel (0) target = $region49
    $region48: #{tpu_custom_call.1} parent=1 // pred_region
      %s1724 = ssub.s32 256, 256
      %1725 = vsyncadd [#allocation5], %s1724
      %s1726 = sshll.u32 [#allocation8], 4
      %s1727 = int_to_ptr.vmem [resolvable:$true] %s1726
      %1732 = dma.vmem_to_hbm [thread:$0]  %s1727, 256, %s9, [#allocation5], 128, 128, 8
    $region49: #{tpu_custom_call.1} parent=1 // pred_fallthru
      _
    // Predicated region
    $region50: #{tpu_custom_call.1} parent=1 // pred_check
      _
    $region51: #{tpu_custom_call.1} parent=1 // pred_check_branch
      %1734 = sbr.rel (0) target = $region53
    $region52: #{tpu_custom_call.1} parent=1 // pred_region
      %1735 = dma.done [#allocation5], 256
    $region53: #{tpu_custom_call.1} parent=1 // pred_fallthru
      _
    %1736 = vsyncpa [#allocation4], 1
    %1737 = vsyncpa [#allocation7], 1
    %1738 = vsyncpa [#allocation5], 1

</llo_original>
